<compile_context>
chip_gen: v6e
topology: v6e:2x2x1
jax: 0.10.0
libtpu: 0.0.40
codegen_flags: <defaults>
</compile_context>

<pallas_src>
import functools

import jax
import jax.numpy as jnp
import numpy as np
from jax.experimental import pallas as pl
from jax.experimental.pallas import tpu as pltpu

KSIZE = 5
STRIDE = 2
C1, C2, C3 = 64, 128, 256            # conv channel widths fixed by the module


def _conv_out_len(L):
    # PyTorch Conv1d, no padding, dilation 1.
    return (L - KSIZE) // STRIDE + 1


# -----------------------------------------------------------------------------
# Fused kernel — one block of B_blk batch elements per grid step.
# Row layout (batch stacked into M):
#   h1q row r = b*M1 + m : quad-packed conv1 outputs 4m..4m+3 of batch b
#   h2r row r            : pair-packed conv2 outputs 2m, 2m+1 of batch b
#                          (rows with m == M1-1 are cross-batch garbage)
#   h3  row r            : conv3 output m of batch b (valid iff m < L3)
# Garbage rows never feed valid rows; the pooling mask P zeroes them.
# -----------------------------------------------------------------------------
def _audio_branch_kernel(t1_ref, p_ref, w1q_ref, b1q_ref, w2b_ref, b2c_ref,
                         w3f_ref, b3_ref, wf_ref, bf_ref, o_ref, *, inv_l3):
    f32, bf16 = jnp.float32, jnp.bfloat16
    R = t1_ref.shape[0]           # B_blk * M1
    R2 = R - 1                    # pair-packed conv2 rows (incl. garbage rows)
    R3 = R - 3                    # conv3 rows (incl. garbage rows)

    # ---- conv1 + ReLU (quad-packed): one (R,20)@(20,256) matmul -------------
    h1 = jnp.dot(t1_ref[...], w1q_ref[...], preferred_element_type=f32)
    h1 = jnp.maximum(h1 + b1q_ref[...], 0.0)                     # f32 (R, 4*C1)

    # ---- conv2 + ReLU: even+odd phases fused into one (R2,512)@(512,256) ----
    # slab2 row r = h1_flat[256r : 256r+512]; block weight holds the even-phase
    # taps (rows 0:320) in columns 0:128 and odd-phase (rows 128:448) in 128:256,
    # so the result is directly the pair-packed h2r.
    slab2 = jnp.concatenate([h1[0:R2, :], h1[1:R, :]], axis=-1).astype(bf16)
    h2 = jnp.dot(slab2, w2b_ref[...], preferred_element_type=f32)
    h2 = jnp.maximum(h2 + b2c_ref[...], 0.0)                     # f32 (R2, 2*C2)

    # ---- conv3 + ReLU: full 640-deep window in one (R3,640)@(640,256) -------
    slab3 = jnp.concatenate([h2[0:R3, :], h2[1:R3 + 1, :],
                             h2[2:R3 + 2, 0:C2]], axis=-1).astype(bf16)
    h3 = jnp.dot(slab3, w3f_ref[...], preferred_element_type=f32)
    h3 = jnp.maximum(h3 + b3_ref[...], 0.0).astype(bf16)         # (R3, C3)

    # ---- AdaptiveAvgPool1d(1) as masked segment-sum matmul, then FC ---------
    psum = jnp.dot(p_ref[...], h3, preferred_element_type=f32)   # (B_blk, C3)
    pooled = (psum * inv_l3).astype(bf16)
    y = jnp.dot(pooled, wf_ref[...], preferred_element_type=f32) + bf_ref[...]
    o_ref[...] = y.astype(o_ref.dtype)                           # (B_blk, O_pad)


def audio_branch_forward(x_ncw, w1q, b1q, w2b, b2c, w3f, b3, wfp, bfp,
                         *, batch_block=None):
    """x_ncw: (B, 1, L) PyTorch NCW input. Returns (B, O_pad) (padded FC out)."""
    B, Cin, L = x_ncw.shape
    assert Cin == 1, "AudioBranch expects a single input channel"
    L1 = _conv_out_len(L)
    if L1 % 4 != 0 or L1 < 16:
        # TODO(synk): generalize the quad packing to conv1 output lengths not
        # divisible by 4 (tail masking); L=100 -> L1=48 satisfies this.
        raise ValueError("fused kernel needs conv1 output length %4==0 and >=16")
    M1 = L1 // 4
    L3 = _conv_out_len(_conv_out_len(L1))        # == M1 - 3
    x = x_ncw[:, 0, :]                           # (B, L)

    # im2col for conv1 only: t1[b, m, 5p+k] = x[b, 8m + 2p + k]  (quad-packed)
    cols = [x[:, 2 * p + k: 2 * p + k + 8 * (M1 - 1) + 1: 8]
            for p in range(4) for k in range(KSIZE)]
    t1 = jnp.stack(cols, axis=-1).astype(jnp.bfloat16)           # (B, M1, 20)

    # Batch blocking: fill MXU M, amortise per-step overhead, keep >=2 grid
    # steps when B>=2 so both v7x TensorCores receive work.
    if batch_block is None:
        batch_block = min(16, max(1, B // 2))
    B_blk = batch_block
    G = (B + B_blk - 1) // B_blk
    Bp = G * B_blk
    if Bp != B:
        t1 = jnp.pad(t1, ((0, Bp - B), (0, 0), (0, 0)))
    R = B_blk * M1
    # Per-step t1 block is (B_blk*M1, 20); the 20-lane width is inherent to the
    # quad-packed im2col (padding to 128 lanes would 6.4x an already tiny DMA).
    t1 = t1.reshape(G, R, 4 * KSIZE)

    # Pooling / batch-segmentation mask: P[b, r] = 1 iff row r of h3 belongs to
    # batch b and is a valid (non-garbage) conv3 position.
    P_np = np.zeros((B_blk, R - 3), np.float32)
    for r in range(R - 3):
        if (r % M1) < L3:
            P_np[r // M1, r] = 1.0
    P = jnp.asarray(P_np, jnp.bfloat16)

    O_pad = wfp.shape[1]
    vmem = pltpu.MemorySpace.VMEM

    def _const_spec(shape):      # whole-array block, same block every grid step
        n = len(shape)
        return pl.BlockSpec(shape, lambda i, _n=n: (0,) * _n, memory_space=vmem)

    kernel = functools.partial(_audio_branch_kernel, inv_l3=1.0 / L3)

    out = pl.pallas_call(
        kernel,
        out_shape=jax.ShapeDtypeStruct((G, B_blk, O_pad), x_ncw.dtype),
        grid_spec=pltpu.PrefetchScalarGridSpec(
            num_scalar_prefetch=0,
            grid=(G,),
            in_specs=[
                pl.BlockSpec((None, R, 4 * KSIZE), lambda i: (i, 0, 0),
                             memory_space=vmem),
                _const_spec(P.shape),
                _const_spec(w1q.shape), _const_spec(b1q.shape),
                _const_spec(w2b.shape), _const_spec(b2c.shape),
                _const_spec(w3f.shape), _const_spec(b3.shape),
                _const_spec(wfp.shape), _const_spec(bfp.shape),
            ],
            out_specs=pl.BlockSpec((None, B_blk, O_pad), lambda i: (i, 0, 0),
                                   memory_space=vmem),
        ),
        compiler_params=pltpu.CompilerParams(
            dimension_semantics=("parallel",)),
    )(t1, P, w1q, b1q, w2b, b2c, w3f, b3, wfp, bfp)
    return out.reshape(Bp, O_pad)[:B]                            # (B, O_pad)


# -----------------------------------------------------------------------------
# Module wrapper with deterministic parameter init (no checkpoint loading).
# NOTE: weights are held as (K, C_in, C_out); a real PyTorch Conv1d checkpoint
# ((C_out, C_in, K)) must be transposed before the repacks below.
# -----------------------------------------------------------------------------
class AudioBranchPallas:
    def __init__(self, key, output_dim=200, dtype=jnp.float32):
        ks = jax.random.split(key, 8)

        def conv_init(kw, kb, c_in, c_out):
            bound = 1.0 / np.sqrt(c_in * KSIZE)
            w = jax.random.uniform(kw, (KSIZE, c_in, c_out), dtype, -bound, bound)
            b = jax.random.uniform(kb, (c_out,), dtype, -bound, bound)
            return w, b

        # Original (PyTorch-equivalent) f32 parameters; used by the reference.
        self.w1, self.b1 = conv_init(ks[0], ks[1], 1, C1)
        self.w2, self.b2 = conv_init(ks[2], ks[3], C1, C2)
        self.w3, self.b3 = conv_init(ks[4], ks[5], C2, C3)
        bound = 1.0 / np.sqrt(C3)
        self.wf = jax.random.uniform(ks[6], (C3, output_dim), dtype, -bound, bound)
        self.bf = jax.random.uniform(ks[7], (output_dim,), dtype, -bound, bound)
        self.output_dim = output_dim

        # --- one-time repack for the fused kernel (off the hot path) ---------
        # conv1: block-diagonal quad packing -> single lane-dense matmul (bf16).
        w1f = self.w1.reshape(KSIZE, C1)                          # (5, 64)
        w1q = jnp.zeros((4 * KSIZE, 4 * C1), dtype)
        for p in range(4):
            w1q = w1q.at[KSIZE * p:KSIZE * (p + 1),
                         C1 * p:C1 * (p + 1)].set(w1f)
        self.w1q = w1q.astype(jnp.bfloat16)                       # (20, 256)
        self.b1q = jnp.tile(self.b1, 4).reshape(1, 4 * C1)        # f32 (1, 256)

        # conv2: even/odd phases merged into one block weight (512, 256).
        w2f = self.w2.reshape(KSIZE * C1, C2)                     # (320, 128)
        w2b = jnp.zeros((8 * C1, 2 * C2), dtype)
        w2b = w2b.at[0:KSIZE * C1, 0:C2].set(w2f)                 # even: rows 0:320
        w2b = w2b.at[2 * C1:2 * C1 + KSIZE * C1, C2:2 * C2].set(w2f)  # odd: 128:448
        self.w2b = w2b.astype(jnp.bfloat16)                       # (512, 256)
        self.b2c = jnp.tile(self.b2, 2).reshape(1, 2 * C2)        # f32 (1, 256)

        # conv3: all 5 taps flattened into the contraction dim.
        self.w3f = self.w3.reshape(KSIZE * C2, C3).astype(jnp.bfloat16)  # (640, 256)
        self.b3r = self.b3.reshape(1, C3)                         # f32 (1, 256)

        # FC: pad output dim up to a multiple of 128 for lane-dense stores.
        O_pad = ((output_dim + 127) // 128) * 128
        self.wf_pad = (jnp.zeros((C3, O_pad), dtype)
                       .at[:, :output_dim].set(self.wf).astype(jnp.bfloat16))
        self.bf_pad = jnp.zeros((1, O_pad), dtype).at[0, :output_dim].set(self.bf)

    def __call__(self, x_ncw):
        y = audio_branch_forward(x_ncw, self.w1q, self.b1q, self.w2b, self.b2c,
                                 self.w3f, self.b3r, self.wf_pad, self.bf_pad)
        return y[:, :self.output_dim]


# Pure-JAX reference (no Pallas). bf16_matmul_inputs=True mirrors the kernel's
# numerics (bf16 matmul operands, f32 accumulation / bias / ReLU).
def _ref_forward(model, x_ncw, *, bf16_matmul_inputs=False):
    bf16 = bf16_matmul_inputs
    cast = (lambda a: a.astype(jnp.bfloat16)) if bf16 else (lambda a: a)
    a = jnp.transpose(x_ncw, (0, 2, 1)).astype(jnp.float32)      # (B, L, 1)

    def conv(a, w, b):
        L_out = _conv_out_len(a.shape[1])
        acc = jnp.zeros((a.shape[0], L_out, w.shape[-1]), jnp.float32)
        for k in range(KSIZE):
            xk = cast(a[:, k:k + STRIDE * L_out:STRIDE, :])
            acc = acc + jnp.einsum('blc,co->blo', xk, cast(w[k]),
                                   precision=jax.lax.Precision.HIGHEST,
                                   preferred_element_type=jnp.float32)
        return jnp.maximum(acc + b[None, None, :], 0.0)

    a = conv(a, model.w1, model.b1)
    a = conv(a, model.w2, model.b2)
    a = conv(a, model.w3, model.b3)
    a_pool = cast(a).astype(jnp.float32) if bf16 else a
    pooled = jnp.sum(a_pool, axis=1) * (1.0 / a.shape[1])
    y = jnp.dot(cast(pooled), cast(model.wf),
                precision=jax.lax.Precision.HIGHEST,
                preferred_element_type=jnp.float32) + model.bf
    return y


if __name__ == "__main__":
    key = jax.random.PRNGKey(0)
    k_param, k_x = jax.random.split(key)

    B, L = 8, 100          # lengths: 100 -> 48 -> 22 -> 9; B_blk=4, grid=(2,)
    output_dim = 200       # module default

    model = AudioBranchPallas(k_param, output_dim=output_dim)
    x = jax.random.normal(k_x, (B, 1, L), dtype=jnp.float32)

    out = jax.block_until_ready(model(x))
    assert out.shape == (B, output_dim)

    # Tight check against a reference that mirrors the kernel's bf16 matmul
    # inputs (validates the packing / window / pooling structure exactly) ...
    ref_bf16 = jax.block_until_ready(_ref_forward(model, x, bf16_matmul_inputs=True))
    np.testing.assert_allclose(np.asarray(out), np.asarray(ref_bf16),
                               rtol=2e-3, atol=2e-3)
    # ... plus a loose sanity check against the full-f32 PyTorch-equivalent
    # reference (bf16 matmul operands are a deliberate perf choice).
    ref_f32 = jax.block_until_ready(_ref_forward(model, x))
    np.testing.assert_allclose(np.asarray(out), np.asarray(ref_f32),
                               rtol=5e-2, atol=5e-2)
    print("KERNEL_OK")
</pallas_src>

<mosaic_0001>
module attributes {stable_mosaic.version = 11 : i64} {
  func.func @_audio_branch_kernel(%arg0: i32, %arg1: memref<1x48x20xbf16, #tpu.memory_space<vmem>>, %arg2: memref<4x45xbf16, #tpu.memory_space<vmem>>, %arg3: memref<20x256xbf16, #tpu.memory_space<vmem>>, %arg4: memref<1x256xf32, #tpu.memory_space<vmem>>, %arg5: memref<512x256xbf16, #tpu.memory_space<vmem>>, %arg6: memref<1x256xf32, #tpu.memory_space<vmem>>, %arg7: memref<640x256xbf16, #tpu.memory_space<vmem>>, %arg8: memref<1x256xf32, #tpu.memory_space<vmem>>, %arg9: memref<256x256xbf16, #tpu.memory_space<vmem>>, %arg10: memref<1x256xf32, #tpu.memory_space<vmem>>, %arg11: memref<1x4x256xf32, #tpu.memory_space<vmem>>) attributes {dimension_semantics = [#tpu.dimension_semantics<parallel>], iteration_bounds = array<i64: 2>, scalar_prefetch = 0 : i64, scratch_operands = 0 : i64, tpu.core_type = #tpu.core_type<tc>, window_params = [{transform_indices = @transform_0, window_bounds = array<i64: 1, 48, 20>}, {pipeline_mode = #tpu.pipeline_mode<synchronous>, transform_indices = @transform_1, window_bounds = array<i64: 4, 45>}, {pipeline_mode = #tpu.pipeline_mode<synchronous>, transform_indices = @transform_2, window_bounds = array<i64: 20, 256>}, {pipeline_mode = #tpu.pipeline_mode<synchronous>, transform_indices = @transform_3, window_bounds = array<i64: 1, 256>}, {pipeline_mode = #tpu.pipeline_mode<synchronous>, transform_indices = @transform_4, window_bounds = array<i64: 512, 256>}, {pipeline_mode = #tpu.pipeline_mode<synchronous>, transform_indices = @transform_5, window_bounds = array<i64: 1, 256>}, {pipeline_mode = #tpu.pipeline_mode<synchronous>, transform_indices = @transform_6, window_bounds = array<i64: 640, 256>}, {pipeline_mode = #tpu.pipeline_mode<synchronous>, transform_indices = @transform_7, window_bounds = array<i64: 1, 256>}, {pipeline_mode = #tpu.pipeline_mode<synchronous>, transform_indices = @transform_8, window_bounds = array<i64: 256, 256>}, {pipeline_mode = #tpu.pipeline_mode<synchronous>, transform_indices = @transform_9, window_bounds = array<i64: 1, 256>}, {transform_indices = @transform_10, window_bounds = array<i64: 1, 4, 256>}]} {
    %c0 = arith.constant 0 : index
    %c0_0 = arith.constant 0 : index
    %c0_1 = arith.constant 0 : index
    %0 = vector.load %arg1[%c0, %c0_0, %c0_1] : memref<1x48x20xbf16, #tpu.memory_space<vmem>>, vector<1x48x20xbf16>
    %1 = vector.shape_cast %0 : vector<1x48x20xbf16> to vector<48x20xbf16>
    %c0_2 = arith.constant 0 : index
    %c0_3 = arith.constant 0 : index
    %2 = vector.load %arg3[%c0_2, %c0_3] : memref<20x256xbf16, #tpu.memory_space<vmem>>, vector<20x256xbf16>
    %cst = arith.constant dense<0.000000e+00> : vector<48x256xf32>
    %3 = tpu.matmul %1, %2, %cst {dimension_numbers = #tpu.dot_dimension_numbers<[1], [0], [0], [1], [0, 0, 1, 1], [], []>} : vector<48x20xbf16>, vector<20x256xbf16>, vector<48x256xf32> -> vector<48x256xf32>
    %c0_4 = arith.constant 0 : index
    %c0_5 = arith.constant 0 : index
    %4 = vector.load %arg4[%c0_4, %c0_5] : memref<1x256xf32, #tpu.memory_space<vmem>>, vector<1x256xf32>
    %5 = vector.broadcast %4 : vector<1x256xf32> to vector<48x256xf32>
    %6 = arith.addf %3, %5 : vector<48x256xf32>
    %cst_6 = arith.constant 0.000000e+00 : f32
    %7 = vector.broadcast %cst_6 : f32 to vector<48x256xf32>
    %8 = arith.maximumf %6, %7 : vector<48x256xf32>
    %9 = vector.extract_strided_slice %8 {offsets = [0, 0], sizes = [47, 256], strides = [1, 1]} : vector<48x256xf32> to vector<47x256xf32>
    %10 = vector.extract_strided_slice %8 {offsets = [1, 0], sizes = [47, 256], strides = [1, 1]} : vector<48x256xf32> to vector<47x256xf32>
    %11 = tpu.concatenate %9, %10 in 1 : vector<47x256xf32>, vector<47x256xf32> -> vector<47x512xf32>
    %12 = arith.truncf %11 : vector<47x512xf32> to vector<47x512xbf16>
    %c0_7 = arith.constant 0 : index
    %c0_8 = arith.constant 0 : index
    %13 = vector.load %arg5[%c0_7, %c0_8] : memref<512x256xbf16, #tpu.memory_space<vmem>>, vector<512x256xbf16>
    %cst_9 = arith.constant dense<0.000000e+00> : vector<47x256xf32>
    %14 = tpu.matmul %12, %13, %cst_9 {dimension_numbers = #tpu.dot_dimension_numbers<[1], [0], [0], [1], [0, 0, 1, 1], [], []>} : vector<47x512xbf16>, vector<512x256xbf16>, vector<47x256xf32> -> vector<47x256xf32>
    %c0_10 = arith.constant 0 : index
    %c0_11 = arith.constant 0 : index
    %15 = vector.load %arg6[%c0_10, %c0_11] : memref<1x256xf32, #tpu.memory_space<vmem>>, vector<1x256xf32>
    %16 = vector.broadcast %15 : vector<1x256xf32> to vector<47x256xf32>
    %17 = arith.addf %14, %16 : vector<47x256xf32>
    %cst_12 = arith.constant 0.000000e+00 : f32
    %18 = vector.broadcast %cst_12 : f32 to vector<47x256xf32>
    %19 = arith.maximumf %17, %18 : vector<47x256xf32>
    %20 = vector.extract_strided_slice %19 {offsets = [0, 0], sizes = [45, 256], strides = [1, 1]} : vector<47x256xf32> to vector<45x256xf32>
    %21 = vector.extract_strided_slice %19 {offsets = [1, 0], sizes = [45, 256], strides = [1, 1]} : vector<47x256xf32> to vector<45x256xf32>
    %22 = vector.extract_strided_slice %19 {offsets = [2, 0], sizes = [45, 128], strides = [1, 1]} : vector<47x256xf32> to vector<45x128xf32>
    %23 = tpu.concatenate %20, %21, %22 in 1 : vector<45x256xf32>, vector<45x256xf32>, vector<45x128xf32> -> vector<45x640xf32>
    %24 = arith.truncf %23 : vector<45x640xf32> to vector<45x640xbf16>
    %c0_13 = arith.constant 0 : index
    %c0_14 = arith.constant 0 : index
    %25 = vector.load %arg7[%c0_13, %c0_14] : memref<640x256xbf16, #tpu.memory_space<vmem>>, vector<640x256xbf16>
    %cst_15 = arith.constant dense<0.000000e+00> : vector<45x256xf32>
    %26 = tpu.matmul %24, %25, %cst_15 {dimension_numbers = #tpu.dot_dimension_numbers<[1], [0], [0], [1], [0, 0, 1, 1], [], []>} : vector<45x640xbf16>, vector<640x256xbf16>, vector<45x256xf32> -> vector<45x256xf32>
    %c0_16 = arith.constant 0 : index
    %c0_17 = arith.constant 0 : index
    %27 = vector.load %arg8[%c0_16, %c0_17] : memref<1x256xf32, #tpu.memory_space<vmem>>, vector<1x256xf32>
    %28 = vector.broadcast %27 : vector<1x256xf32> to vector<45x256xf32>
    %29 = arith.addf %26, %28 : vector<45x256xf32>
    %cst_18 = arith.constant 0.000000e+00 : f32
    %30 = vector.broadcast %cst_18 : f32 to vector<45x256xf32>
    %31 = arith.maximumf %29, %30 : vector<45x256xf32>
    %32 = arith.truncf %31 : vector<45x256xf32> to vector<45x256xbf16>
    %c0_19 = arith.constant 0 : index
    %c0_20 = arith.constant 0 : index
    %33 = vector.load %arg2[%c0_19, %c0_20] : memref<4x45xbf16, #tpu.memory_space<vmem>>, vector<4x45xbf16>
    %cst_21 = arith.constant dense<0.000000e+00> : vector<4x256xf32>
    %34 = tpu.matmul %33, %32, %cst_21 {dimension_numbers = #tpu.dot_dimension_numbers<[1], [0], [0], [1], [0, 0, 1, 1], [], []>} : vector<4x45xbf16>, vector<45x256xbf16>, vector<4x256xf32> -> vector<4x256xf32>
    %cst_22 = arith.constant 0.111111112 : f32
    %35 = vector.broadcast %cst_22 : f32 to vector<4x256xf32>
    %36 = arith.mulf %34, %35 : vector<4x256xf32>
    %37 = arith.truncf %36 : vector<4x256xf32> to vector<4x256xbf16>
    %c0_23 = arith.constant 0 : index
    %c0_24 = arith.constant 0 : index
    %38 = vector.load %arg9[%c0_23, %c0_24] : memref<256x256xbf16, #tpu.memory_space<vmem>>, vector<256x256xbf16>
    %cst_25 = arith.constant dense<0.000000e+00> : vector<4x256xf32>
    %39 = tpu.matmul %37, %38, %cst_25 {dimension_numbers = #tpu.dot_dimension_numbers<[1], [0], [0], [1], [0, 0, 1, 1], [], []>} : vector<4x256xbf16>, vector<256x256xbf16>, vector<4x256xf32> -> vector<4x256xf32>
    %c0_26 = arith.constant 0 : index
    %c0_27 = arith.constant 0 : index
    %40 = vector.load %arg10[%c0_26, %c0_27] : memref<1x256xf32, #tpu.memory_space<vmem>>, vector<1x256xf32>
    %41 = vector.broadcast %40 : vector<1x256xf32> to vector<4x256xf32>
    %42 = arith.addf %39, %41 : vector<4x256xf32>
    %c0_28 = arith.constant 0 : index
    %c0_29 = arith.constant 0 : index
    %c0_30 = arith.constant 0 : index
    %43 = vector.load %arg11[%c0_28, %c0_29, %c0_30] : memref<1x4x256xf32, #tpu.memory_space<vmem>>, vector<1x4x256xf32>
    %44 = vector.shape_cast %43 : vector<1x4x256xf32> to vector<4x256xf32>
    %45 = vector.shape_cast %42 : vector<4x256xf32> to vector<1x4x256xf32>
    tpu.vector_store %arg11[%c0_28, %c0_29, %c0_30], %45 {strides = array<i32>} : memref<1x4x256xf32, #tpu.memory_space<vmem>>, vector<1x4x256xf32>,
    return
  }
  func.func @transform_0(%arg0: i32) -> (i32, i32, i32) {
    %c0_i32 = arith.constant 0 : i32
    %c0_i32_0 = arith.constant 0 : i32
    %c0_i32_1 = arith.constant 0 : i32
    return %arg0, %c0_i32, %c0_i32_0 : i32, i32, i32
  }
  func.func @transform_1(%arg0: i32) -> (i32, i32) {
    %c0_i32 = arith.constant 0 : i32
    %c0_i32_0 = arith.constant 0 : i32
    %c0_i32_1 = arith.constant 0 : i32
    return %c0_i32, %c0_i32_0 : i32, i32
  }
  func.func @transform_2(%arg0: i32) -> (i32, i32) {
    %c0_i32 = arith.constant 0 : i32
    %c0_i32_0 = arith.constant 0 : i32
    %c0_i32_1 = arith.constant 0 : i32
    return %c0_i32, %c0_i32_0 : i32, i32
  }
  func.func @transform_3(%arg0: i32) -> (i32, i32) {
    %c0_i32 = arith.constant 0 : i32
    %c0_i32_0 = arith.constant 0 : i32
    %c0_i32_1 = arith.constant 0 : i32
    return %c0_i32, %c0_i32_0 : i32, i32
  }
  func.func @transform_4(%arg0: i32) -> (i32, i32) {
    %c0_i32 = arith.constant 0 : i32
    %c0_i32_0 = arith.constant 0 : i32
    %c0_i32_1 = arith.constant 0 : i32
    return %c0_i32, %c0_i32_0 : i32, i32
  }
  func.func @transform_5(%arg0: i32) -> (i32, i32) {
    %c0_i32 = arith.constant 0 : i32
    %c0_i32_0 = arith.constant 0 : i32
    %c0_i32_1 = arith.constant 0 : i32
    return %c0_i32, %c0_i32_0 : i32, i32
  }
  func.func @transform_6(%arg0: i32) -> (i32, i32) {
    %c0_i32 = arith.constant 0 : i32
    %c0_i32_0 = arith.constant 0 : i32
    %c0_i32_1 = arith.constant 0 : i32
    return %c0_i32, %c0_i32_0 : i32, i32
  }
  func.func @transform_7(%arg0: i32) -> (i32, i32) {
    %c0_i32 = arith.constant 0 : i32
    %c0_i32_0 = arith.constant 0 : i32
    %c0_i32_1 = arith.constant 0 : i32
    return %c0_i32, %c0_i32_0 : i32, i32
  }
  func.func @transform_8(%arg0: i32) -> (i32, i32) {
    %c0_i32 = arith.constant 0 : i32
    %c0_i32_0 = arith.constant 0 : i32
    %c0_i32_1 = arith.constant 0 : i32
    return %c0_i32, %c0_i32_0 : i32, i32
  }
  func.func @transform_9(%arg0: i32) -> (i32, i32) {
    %c0_i32 = arith.constant 0 : i32
    %c0_i32_0 = arith.constant 0 : i32
    %c0_i32_1 = arith.constant 0 : i32
    return %c0_i32, %c0_i32_0 : i32, i32
  }
  func.func @transform_10(%arg0: i32) -> (i32, i32, i32) {
    %c0_i32 = arith.constant 0 : i32
    %c0_i32_0 = arith.constant 0 : i32
    %c0_i32_1 = arith.constant 0 : i32
    return %arg0, %c0_i32, %c0_i32_0 : i32, i32, i32
  }
}

</mosaic_0001>

<llo_original>
// kernel: tpu_custom_call.1
$region0: #{tpu_custom_call.1}
  #allocation0 [shape = 'u32[]', space=smem, size = 0x4, offset = 0x4, fixed_abs, tag = 'smem constant byte address 0x4 - core index']
  #allocation1 [shape = 'u32[144,128]{1,0:T(1,128)}', space=vmem, size = 0x12000, scoped, tag = 'internal scratch']
  %s0 = inlined_call_operand.vmem [shape: bf16[2,48,20], index: 0, kind: input, shape index: {}]
  %s1 = inlined_call_operand.vmem [shape: bf16[4,45], index: 1, kind: input, shape index: {}]
  %s2 = inlined_call_operand.vmem [shape: bf16[20,256], index: 2, kind: input, shape index: {}]
  %s3 = inlined_call_operand.vmem [shape: f32[1,256], index: 3, kind: input, shape index: {}]
  %s4 = inlined_call_operand.hbm [shape: bf16[512,256], index: 4, kind: input, shape index: {}]
  %s5 = inlined_call_operand.vmem [shape: f32[1,256], index: 5, kind: input, shape index: {}]
  %s6 = inlined_call_operand.hbm [shape: bf16[640,256], index: 6, kind: input, shape index: {}]
  %s7 = inlined_call_operand.vmem [shape: f32[1,256], index: 7, kind: input, shape index: {}]
  %s8 = inlined_call_operand.hbm [shape: bf16[256,256], index: 8, kind: input, shape index: {}]
  %s9 = inlined_call_operand.vmem [shape: f32[1,256], index: 9, kind: input, shape index: {}]
  %s10 = inlined_call_operand.hbm [shape: f32[2,4,256], index: 10, kind: output, shape index: {}]
  %s11 = sld [smem:[#allocation0]]
  $region85: #{tpu_custom_call.1} parent=0
    _
  %s13 = ssub.s32 1, %s11
  %s14 = scalar_select 0, %s13, %s11
  $region1: #{tpu_custom_call.1} parent=0
    #allocation2 [shape = 'u8[262144]{0}', space=vmem, size = 0x40000, scoped, tag = 'input window, operand 4, single buffered']
    #allocation3 [shape = 's32[2]{0}', space=sflag, size = 0x8, scoped, tag = 'scoped memory for tpu_custom_call.1']
    #allocation4 [shape = 's32[2]{0}', space=sflag, size = 0x8, scoped, tag = 'scoped memory for tpu_custom_call.1']
    #allocation5 [shape = 'u8[327680]{0}', space=vmem, size = 0x50000, scoped, tag = 'input window, operand 6, single buffered']
    #allocation6 [shape = 's32[1]{0}', space=sflag, size = 0x4, scoped, tag = 'scoped memory for tpu_custom_call.1']
    #allocation7 [shape = 'u8[131072]{0}', space=vmem, size = 0x20000, scoped, tag = 'input window, operand 8, single buffered']
    #allocation8 [shape = 'u8[8192]{0}', space=vmem, size = 0x2000, scoped, tag = 'output window, operand 0']
    %15 = vsyncpa [#allocation3], 0
    %16 = vsyncpa [#allocation6], 0
    %17 = vsyncpa [#allocation4], 0
    %s18 = scalar_lea.sflag [#allocation4], 1
    %19 = vsyncpa %s18, 0
    loop: start=0, step=1, limit=4
    $region2: #{tpu_custom_call.1} parent=1 // loop_pre_header
      _
    $region3: #{tpu_custom_call.1} parent=1 // loop_header
      %s21 = sphi 0, %s25
      %p22 = scmp.ge.s32.totalorder %s21, 4
      %s31 = sphi 0, %s33
      %s34 = sphi 0, %s31
      %s35 = sphi 0, %s34
      %s51 = sphi 0, %s35
      %s55 = sphi 0, %s55
      %s57 = sphi 0, %s55
      %s58 = sphi 0, %s57
      %s72 = sphi 0, %s58
      %s76 = sphi 0, %s76
      %s78 = sphi 0, %s76
      %s79 = sphi 0, %s78
      %s93 = sphi 0, %s79
      %s97 = sphi 0, %s97
      %s99 = sphi 0, %s97
      %s100 = sphi 0, %s99
      %s114 = sphi 0, %s100
      %s118 = sphi 0, %s118
      %s120 = sphi 0, %s118
      %s121 = sphi 0, %s120
      %s135 = sphi 0, %s121
      %s139 = sphi 0, %s139
      %s141 = sphi 0, %s139
      %s142 = sphi 0, %s141
      %s156 = sphi 0, %s142
      %s160 = sphi 0, %s160
      %s162 = sphi 0, %s160
      %s163 = sphi 0, %s162
      %s177 = sphi 0, %s163
      %s181 = sphi 0, %s181
      %s183 = sphi 0, %s181
      %s184 = sphi 0, %s183
      %s198 = sphi 0, %s184
      %s202 = sphi 0, %s202
      %s204 = sphi 0, %s202
      %s205 = sphi 0, %s204
      %s219 = sphi 0, %s205
      %s223 = sphi 0, %s223
      %s225 = sphi 0, %s223
      %s226 = sphi 0, %s225
      %s240 = sphi 0, %s226
      %s246 = sphi 0, %s248
      %s249 = sphi 0, %s246
      %s250 = sphi 0, %s249
      %s266 = sphi 0, %s250
    $region4: #{tpu_custom_call.1} parent=1 // loop_header_branch
      %24 = sbr.rel (%p22) target = $region8
    $region5: #{tpu_custom_call.1} parent=1 // loop_body
      %s26 = ssub.s32 %s21, 1
      %s27 = ssub.s32 %s21, 2
      %s28 = sadd.s32 %s21, 1
      %s29 = ssub.s32 %s21, %s28
      %p30 = scmp.eq.s32.totalorder %s29, 0
      %s32 = sadd.s32 %s31, 1
      %s33 = scalar_select %p30, %s31, %s32
      %p36 = pneg %p30
      %p37 = scmp.eq.s32.totalorder %s21, 1
      %p38 = por %p36, %p37
      %p39 = scmp.ne.s32.totalorder %s31, %s34
      %p40 = scmp.eq.s32.totalorder %s21, 0
      %p41 = por %p39, %p40
      %p42 = scmp.ne.s32.totalorder %s31, %s34
      %p43 = scmp.eq.s32.totalorder %s26, 1
      %p44 = por %p42, %p43
      %p45 = scmp.ne.s32.totalorder %s34, %s35
      %p46 = scmp.eq.s32.totalorder %s26, 0
      %p47 = por %p45, %p46
      %p48 = scmp.ne.s32.totalorder %s34, %s35
      %p49 = scmp.eq.s32.totalorder %s27, 1
      %p50 = por %p48, %p49
      %p52 = scmp.ne.s32.totalorder %s35, %s51
      %p53 = scmp.eq.s32.totalorder %s27, 0
      %p54 = por %p52, %p53
      %s56 = sadd.s32 %s55, 1
      %p59 = scmp.eq.s32.totalorder %s21, 1
      %p60 = scmp.ne.s32.totalorder %s55, %s57
      %p61 = scmp.eq.s32.totalorder %s21, 0
      %p62 = por %p60, %p61
      %p63 = scmp.ne.s32.totalorder %s55, %s57
      %p64 = scmp.eq.s32.totalorder %s26, 1
      %p65 = por %p63, %p64
      %p66 = scmp.ne.s32.totalorder %s57, %s58
      %p67 = scmp.eq.s32.totalorder %s26, 0
      %p68 = por %p66, %p67
      %p69 = scmp.ne.s32.totalorder %s57, %s58
      %p70 = scmp.eq.s32.totalorder %s27, 1
      %p71 = por %p69, %p70
      %p73 = scmp.ne.s32.totalorder %s58, %s72
      %p74 = scmp.eq.s32.totalorder %s27, 0
      %p75 = por %p73, %p74
      %s77 = sadd.s32 %s76, 1
      %p80 = scmp.eq.s32.totalorder %s21, 1
      %p81 = scmp.ne.s32.totalorder %s76, %s78
      %p82 = scmp.eq.s32.totalorder %s21, 0
      %p83 = por %p81, %p82
      %p84 = scmp.ne.s32.totalorder %s76, %s78
      %p85 = scmp.eq.s32.totalorder %s26, 1
      %p86 = por %p84, %p85
      %p87 = scmp.ne.s32.totalorder %s78, %s79
      %p88 = scmp.eq.s32.totalorder %s26, 0
      %p89 = por %p87, %p88
      %p90 = scmp.ne.s32.totalorder %s78, %s79
      %p91 = scmp.eq.s32.totalorder %s27, 1
      %p92 = por %p90, %p91
      %p94 = scmp.ne.s32.totalorder %s79, %s93
      %p95 = scmp.eq.s32.totalorder %s27, 0
      %p96 = por %p94, %p95
      %s98 = sadd.s32 %s97, 1
      %p101 = scmp.eq.s32.totalorder %s21, 1
      %p102 = scmp.ne.s32.totalorder %s97, %s99
      %p103 = scmp.eq.s32.totalorder %s21, 0
      %p104 = por %p102, %p103
      %p105 = scmp.ne.s32.totalorder %s97, %s99
      %p106 = scmp.eq.s32.totalorder %s26, 1
      %p107 = por %p105, %p106
      %p108 = scmp.ne.s32.totalorder %s99, %s100
      %p109 = scmp.eq.s32.totalorder %s26, 0
      %p110 = por %p108, %p109
      %p111 = scmp.ne.s32.totalorder %s99, %s100
      %p112 = scmp.eq.s32.totalorder %s27, 1
      %p113 = por %p111, %p112
      %p115 = scmp.ne.s32.totalorder %s100, %s114
      %p116 = scmp.eq.s32.totalorder %s27, 0
      %p117 = por %p115, %p116
      %s119 = sadd.s32 %s118, 1
      %p122 = scmp.eq.s32.totalorder %s21, 1
      %p123 = scmp.ne.s32.totalorder %s118, %s120
      %p124 = scmp.eq.s32.totalorder %s21, 0
      %p125 = por %p123, %p124
      %p126 = scmp.ne.s32.totalorder %s118, %s120
      %p127 = scmp.eq.s32.totalorder %s26, 1
      %p128 = por %p126, %p127
      %p129 = scmp.ne.s32.totalorder %s120, %s121
      %p130 = scmp.eq.s32.totalorder %s26, 0
      %p131 = por %p129, %p130
      %p132 = scmp.ne.s32.totalorder %s120, %s121
      %p133 = scmp.eq.s32.totalorder %s27, 1
      %p134 = por %p132, %p133
      %p136 = scmp.ne.s32.totalorder %s121, %s135
      %p137 = scmp.eq.s32.totalorder %s27, 0
      %p138 = por %p136, %p137
      %s140 = sadd.s32 %s139, 1
      %p143 = scmp.eq.s32.totalorder %s21, 1
      %p144 = scmp.ne.s32.totalorder %s139, %s141
      %p145 = scmp.eq.s32.totalorder %s21, 0
      %p146 = por %p144, %p145
      %p147 = scmp.ne.s32.totalorder %s139, %s141
      %p148 = scmp.eq.s32.totalorder %s26, 1
      %p149 = por %p147, %p148
      %p150 = scmp.ne.s32.totalorder %s141, %s142
      %p151 = scmp.eq.s32.totalorder %s26, 0
      %p152 = por %p150, %p151
      %p153 = scmp.ne.s32.totalorder %s141, %s142
      %p154 = scmp.eq.s32.totalorder %s27, 1
      %p155 = por %p153, %p154
      %p157 = scmp.ne.s32.totalorder %s142, %s156
      %p158 = scmp.eq.s32.totalorder %s27, 0
      %p159 = por %p157, %p158
      %s161 = sadd.s32 %s160, 1
      %p164 = scmp.eq.s32.totalorder %s21, 1
      %p165 = scmp.ne.s32.totalorder %s160, %s162
      %p166 = scmp.eq.s32.totalorder %s21, 0
      %p167 = por %p165, %p166
      %p168 = scmp.ne.s32.totalorder %s160, %s162
      %p169 = scmp.eq.s32.totalorder %s26, 1
      %p170 = por %p168, %p169
      %p171 = scmp.ne.s32.totalorder %s162, %s163
      %p172 = scmp.eq.s32.totalorder %s26, 0
      %p173 = por %p171, %p172
      %p174 = scmp.ne.s32.totalorder %s162, %s163
      %p175 = scmp.eq.s32.totalorder %s27, 1
      %p176 = por %p174, %p175
      %p178 = scmp.ne.s32.totalorder %s163, %s177
      %p179 = scmp.eq.s32.totalorder %s27, 0
      %p180 = por %p178, %p179
      %s182 = sadd.s32 %s181, 1
      %p185 = scmp.eq.s32.totalorder %s21, 1
      %p186 = scmp.ne.s32.totalorder %s181, %s183
      %p187 = scmp.eq.s32.totalorder %s21, 0
      %p188 = por %p186, %p187
      %p189 = scmp.ne.s32.totalorder %s181, %s183
      %p190 = scmp.eq.s32.totalorder %s26, 1
      %p191 = por %p189, %p190
      %p192 = scmp.ne.s32.totalorder %s183, %s184
      %p193 = scmp.eq.s32.totalorder %s26, 0
      %p194 = por %p192, %p193
      %p195 = scmp.ne.s32.totalorder %s183, %s184
      %p196 = scmp.eq.s32.totalorder %s27, 1
      %p197 = por %p195, %p196
      %p199 = scmp.ne.s32.totalorder %s184, %s198
      %p200 = scmp.eq.s32.totalorder %s27, 0
      %p201 = por %p199, %p200
      %s203 = sadd.s32 %s202, 1
      %p206 = scmp.eq.s32.totalorder %s21, 1
      %p207 = scmp.ne.s32.totalorder %s202, %s204
      %p208 = scmp.eq.s32.totalorder %s21, 0
      %p209 = por %p207, %p208
      %p210 = scmp.ne.s32.totalorder %s202, %s204
      %p211 = scmp.eq.s32.totalorder %s26, 1
      %p212 = por %p210, %p211
      %p213 = scmp.ne.s32.totalorder %s204, %s205
      %p214 = scmp.eq.s32.totalorder %s26, 0
      %p215 = por %p213, %p214
      %p216 = scmp.ne.s32.totalorder %s204, %s205
      %p217 = scmp.eq.s32.totalorder %s27, 1
      %p218 = por %p216, %p217
      %p220 = scmp.ne.s32.totalorder %s205, %s219
      %p221 = scmp.eq.s32.totalorder %s27, 0
      %p222 = por %p220, %p221
      %s224 = sadd.s32 %s223, 1
      %p227 = scmp.eq.s32.totalorder %s21, 1
      %p228 = scmp.ne.s32.totalorder %s223, %s225
      %p229 = scmp.eq.s32.totalorder %s21, 0
      %p230 = por %p228, %p229
      %p231 = scmp.ne.s32.totalorder %s223, %s225
      %p232 = scmp.eq.s32.totalorder %s26, 1
      %p233 = por %p231, %p232
      %p234 = scmp.ne.s32.totalorder %s225, %s226
      %p235 = scmp.eq.s32.totalorder %s26, 0
      %p236 = por %p234, %p235
      %p237 = scmp.ne.s32.totalorder %s225, %s226
      %p238 = scmp.eq.s32.totalorder %s27, 1
      %p239 = por %p237, %p238
      %p241 = scmp.ne.s32.totalorder %s226, %s240
      %p242 = scmp.eq.s32.totalorder %s27, 0
      %p243 = por %p241, %p242
      %s244 = ssub.s32 %s21, %s28
      %p245 = scmp.eq.s32.totalorder %s244, 0
      %s247 = sadd.s32 %s246, 1
      %s248 = scalar_select %p245, %s246, %s247
      %p251 = pneg %p245
      %p252 = scmp.eq.s32.totalorder %s21, 1
      %p253 = por %p251, %p252
      %p254 = scmp.ne.s32.totalorder %s246, %s249
      %p255 = scmp.eq.s32.totalorder %s21, 0
      %p256 = por %p254, %p255
      %p257 = scmp.ne.s32.totalorder %s246, %s249
      %p258 = scmp.eq.s32.totalorder %s26, 1
      %p259 = por %p257, %p258
      %p260 = scmp.ne.s32.totalorder %s249, %s250
      %p261 = scmp.eq.s32.totalorder %s26, 0
      %p262 = por %p260, %p261
      %p263 = scmp.ne.s32.totalorder %s249, %s250
      %p264 = scmp.eq.s32.totalorder %s27, 1
      %p265 = por %p263, %p264
      %p267 = scmp.ne.s32.totalorder %s250, %s266
      %p268 = scmp.eq.s32.totalorder %s27, 0
      %p269 = por %p267, %p268
      %p270 = scmp.le.s32.totalorder 1, %s21
      %p271 = scmp.lt.s32.totalorder %s21, 3
      %p272 = pnand %p270, %p271
      %p273 = pneg %p272
      // Predicated region
      $region9: #{tpu_custom_call.1} parent=5 // pred_check
        _
      $region10: #{tpu_custom_call.1} parent=5 // pred_check_branch
        %275 = sbr.rel (%p272) target = $region12
      $region11: #{tpu_custom_call.1} parent=5 // pred_region
        %s276 = ssub.s32 %s21, 1
        // Predicated region
        $region13: #{tpu_custom_call.1} parent=11 // pred_check
          %p277 = pneg %p68
        $region14: #{tpu_custom_call.1} parent=11 // pred_check_branch
          %279 = sbr.rel (%p277) target = $region16
        $region15: #{tpu_custom_call.1} parent=11 // pred_region
          _
        $region16: #{tpu_custom_call.1} parent=11 // pred_fallthru
          _
        // Predicated region
        $region17: #{tpu_custom_call.1} parent=11 // pred_check
          %p280 = pneg %p89
        $region18: #{tpu_custom_call.1} parent=11 // pred_check_branch
          %282 = sbr.rel (%p280) target = $region20
        $region19: #{tpu_custom_call.1} parent=11 // pred_region
          _
        $region20: #{tpu_custom_call.1} parent=11 // pred_fallthru
          _
        // Predicated region
        $region21: #{tpu_custom_call.1} parent=11 // pred_check
          %p283 = pneg %p110
        $region22: #{tpu_custom_call.1} parent=11 // pred_check_branch
          %285 = sbr.rel (%p283) target = $region24
        $region23: #{tpu_custom_call.1} parent=11 // pred_region
          _
        $region24: #{tpu_custom_call.1} parent=11 // pred_fallthru
          _
        // Predicated region
        $region25: #{tpu_custom_call.1} parent=11 // pred_check
          %p286 = pneg %p131
        $region26: #{tpu_custom_call.1} parent=11 // pred_check_branch
          %288 = sbr.rel (%p286) target = $region28
        $region27: #{tpu_custom_call.1} parent=11 // pred_region
          %s290 = ssub.s32 8192, 8192
          %291 = vsyncadd [#allocation3], %s290
          %s292 = sshll.u32 [#allocation2], 4
          %s293 = int_to_ptr.vmem [resolvable:$true] %s292
          %298 = dma.hbm_to_vmem [thread:$0]  %s4, 8192, %s293, [#allocation3], 128, 128, 8
        $region28: #{tpu_custom_call.1} parent=11 // pred_fallthru
          _
        // Predicated region
        $region29: #{tpu_custom_call.1} parent=11 // pred_check
          %p299 = pneg %p152
        $region30: #{tpu_custom_call.1} parent=11 // pred_check_branch
          %301 = sbr.rel (%p299) target = $region32
        $region31: #{tpu_custom_call.1} parent=11 // pred_region
          _
        $region32: #{tpu_custom_call.1} parent=11 // pred_fallthru
          _
        // Predicated region
        $region33: #{tpu_custom_call.1} parent=11 // pred_check
          %p302 = pneg %p173
        $region34: #{tpu_custom_call.1} parent=11 // pred_check_branch
          %304 = sbr.rel (%p302) target = $region36
        $region35: #{tpu_custom_call.1} parent=11 // pred_region
          %s306 = ssub.s32 10240, 10240
          %307 = vsyncadd [#allocation6], %s306
          %s308 = sshll.u32 [#allocation5], 4
          %s309 = int_to_ptr.vmem [resolvable:$true] %s308
          %314 = dma.hbm_to_vmem [thread:$0]  %s6, 10240, %s309, [#allocation6], 128, 128, 8
        $region36: #{tpu_custom_call.1} parent=11 // pred_fallthru
          _
        // Predicated region
        $region37: #{tpu_custom_call.1} parent=11 // pred_check
          %p315 = pneg %p194
        $region38: #{tpu_custom_call.1} parent=11 // pred_check_branch
          %317 = sbr.rel (%p315) target = $region40
        $region39: #{tpu_custom_call.1} parent=11 // pred_region
          _
        $region40: #{tpu_custom_call.1} parent=11 // pred_fallthru
          _
        // Predicated region
        $region41: #{tpu_custom_call.1} parent=11 // pred_check
          %p318 = pneg %p215
        $region42: #{tpu_custom_call.1} parent=11 // pred_check_branch
          %320 = sbr.rel (%p318) target = $region44
        $region43: #{tpu_custom_call.1} parent=11 // pred_region
          %s322 = ssub.s32 4096, 4096
          %323 = vsyncadd [#allocation6], %s322
          %s324 = sshll.u32 [#allocation7], 4
          %s325 = int_to_ptr.vmem [resolvable:$true] %s324
          %330 = dma.hbm_to_vmem [thread:$0]  %s8, 4096, %s325, [#allocation6], 128, 128, 8
        $region44: #{tpu_custom_call.1} parent=11 // pred_fallthru
          _
        // Predicated region
        $region45: #{tpu_custom_call.1} parent=11 // pred_check
          %p331 = pneg %p236
        $region46: #{tpu_custom_call.1} parent=11 // pred_check_branch
          %333 = sbr.rel (%p331) target = $region48
        $region47: #{tpu_custom_call.1} parent=11 // pred_region
          _
        $region48: #{tpu_custom_call.1} parent=11 // pred_fallthru
          _
      $region12: #{tpu_custom_call.1} parent=5 // pred_fallthru
        _
      %p334 = scmp.lt.s32.totalorder %s21, 2
      // Predicated region
      $region49: #{tpu_custom_call.1} parent=5 // pred_check
        %p335 = pneg %p334
      $region50: #{tpu_custom_call.1} parent=5 // pred_check_branch
        %337 = sbr.rel (%p335) target = $region52
      $region51: #{tpu_custom_call.1} parent=5 // pred_region
        // Predicated region
        $region53: #{tpu_custom_call.1} parent=51 // pred_check
          %p338 = pneg %p41
        $region54: #{tpu_custom_call.1} parent=51 // pred_check_branch
          %340 = sbr.rel (%p338) target = $region56
        $region55: #{tpu_custom_call.1} parent=51 // pred_region
          %p341 = scmp.lt.s32.totalorder %s21, 1
          %s342 = scalar_select %p341, %s21, 1
          %s343 = smul.addr %s342, 6
          %s344 = smul.addr %s343, 4
          %s345 = scalar_lea.vmem %s0, %s344
        $region56: #{tpu_custom_call.1} parent=51 // pred_fallthru
          _
      $region52: #{tpu_custom_call.1} parent=5 // pred_fallthru
        _
      %p346 = scmp.le.s32.totalorder 1, %s21
      %p347 = scmp.lt.s32.totalorder %s21, 3
      %p348 = pnand %p346, %p347
      %p349 = pneg %p348
      // Predicated region
      $region57: #{tpu_custom_call.1} parent=5 // pred_check
        _
      $region58: #{tpu_custom_call.1} parent=5 // pred_check_branch
        %351 = sbr.rel (%p348) target = $region60
      $region59: #{tpu_custom_call.1} parent=5 // pred_region
        %s352 = ssub.s32 %s21, 1
        // Predicated region
        $region61: #{tpu_custom_call.1} parent=59 // pred_check
          %p353 = pneg %p131
        $region62: #{tpu_custom_call.1} parent=59 // pred_check_branch
          %355 = sbr.rel (%p353) target = $region64
        $region63: #{tpu_custom_call.1} parent=59 // pred_region
          %356 = dma.done [#allocation3], 8192
        $region64: #{tpu_custom_call.1} parent=59 // pred_fallthru
          _
        // Predicated region
        $region65: #{tpu_custom_call.1} parent=59 // pred_check
          %p357 = pneg %p173
        $region66: #{tpu_custom_call.1} parent=59 // pred_check_branch
          %359 = sbr.rel (%p357) target = $region68
        $region67: #{tpu_custom_call.1} parent=59 // pred_region
          %360 = dma.done [#allocation6], 10240
        $region68: #{tpu_custom_call.1} parent=59 // pred_fallthru
          _
        // Predicated region
        $region69: #{tpu_custom_call.1} parent=59 // pred_check
          %p361 = pneg %p215
        $region70: #{tpu_custom_call.1} parent=59 // pred_check_branch
          %363 = sbr.rel (%p361) target = $region72
        $region71: #{tpu_custom_call.1} parent=59 // pred_region
          %364 = dma.done [#allocation6], 4096
        $region72: #{tpu_custom_call.1} parent=59 // pred_fallthru
          _
        %p365 = scmp.lt.s32.totalorder %s26, 1
        %s366 = scalar_select %p365, %s26, 1
        %s367 = smul.addr %s366, 6
        %s368 = smul.addr %s367, 4
        %s369 = scalar_lea.vmem %s0, %s368
        %p370 = pneg %p47
        %p371 = pneg %p44
        %p372 = pneg %p68
        %p373 = pneg %p65
        %p374 = pneg %p89
        %p375 = pneg %p86
        %p376 = pneg %p110
        %p377 = pneg %p107
        %p378 = pneg %p131
        %p379 = pneg %p128
        %p380 = pneg %p152
        %p381 = pneg %p149
        %p382 = pneg %p173
        %p383 = pneg %p170
        %p384 = pneg %p194
        %p385 = pneg %p191
        %p386 = pneg %p215
        %p387 = pneg %p212
        %p388 = pneg %p236
        %p389 = pneg %p233
        %p390 = pneg %p262
        %p391 = pneg %p259
        %s392 = sand.u32 %s249, 1
        %s393 = scalar_lea.sflag [#allocation4], %s392
        %s394 = sand.u32 %s249, 1
        %s395 = smul.addr %s394, 8
        %s396 = scalar_lea.vmem [#allocation8], %s395
        %p397 = scmp.lt.s32.totalorder %s26, 1
        %s398 = scalar_select %p397, %s26, 1
        %s399 = smul.addr %s398, 6
        %s400 = smul.addr %s399, 4
        %s401 = scalar_lea.vmem %s0, %s400
        %v403 = vld [vmem:[%s401] sm:$0xf]
        %v404 = vld [vmem:[%s401 + $0x4] sm:$0xf]
        %v405 = vld [vmem:[%s401 + $0x8] sm:$0xf]
        %v406 = vld [vmem:[%s401 + $0xc] sm:$0xf]
        %v407 = vld [vmem:[%s401 + $0x10] sm:$0xf]
        %v408 = vld [vmem:[%s401 + $0x14] sm:$0xf]
        %v409 = vld [vmem:[%s2] sm:$0xff]
        %v410 = vld [vmem:[%s2 + $0x8] sm:$0xff]
        %v411 = vld [vmem:[%s2 + $0x10] sm:$0x33]
        %v412 = vld [vmem:[%s3] sm:$0x3]
        %v414 = vlaneseq
        %v415 = vshrl.u32 %v414, 7
        %v416 = vsub.s32 0, %v415
        %v417 = vrot.slane %v412, %v416
        %v418 = vlaneseq
        %v419 = vshrl.u32 %v418, 7
        %v420 = vsub.s32 1, %v419
        %v421 = vrot.slane %v412, %v420
        %v430 = vunpack.c.l.b16 %v403
        %v431 = vunpack.c.l.b16 %v404
        %v432 = vunpack.c.l.b16 %v405
        %v433 = vunpack.c.l.b16 %v406
        %v434 = vunpack.c.l.b16 %v407
        %v435 = vunpack.c.l.b16 %v408
        %v436 = vpack.c.b16 %v431, %v430
        %v437 = vpack.c.b16 %v433, %v432
        %v438 = vpack.c.b16 %v435, %v434
        %v442 = vunpack.c.l.b16 %v409
        %v443 = vunpack.c.h.b16 %v409
        %v444 = vunpack.c.l.b16 %v410
        %v445 = vunpack.c.h.b16 %v410
        %v446 = vunpack.c.l.b16 %v411
        %v447 = vunpack.c.h.b16 %v411
        %v448 = vpack.c.b16 %v444, %v442
        %v449 = vpack.c.b16 %v445, %v443
        %v450 = vpack.c.b16 %v446, %v446
        %v451 = vpack.c.b16 %v447, %v447
        %vm454 = vcmask 162816
        %v456 = vsel %vm454, %v436, 0
        %v459 = vsel %vm454, %v437, 0
        %v462 = vsel %vm454, %v438, 0
        %vm464 = vcmask 1041408
        %v466 = vsel %vm464, %v450, 0
        %v469 = vsel %vm464, %v451, 0
        %471 = vmatprep.subr.bf16.mxu0 0
        %472 = vmatpush1.bf16.msra.mxu0 0
        %473 = vmatprep.subr.bf16.mxu0 0
        %474 = vmatpush1.bf16.msra.mxu0 0
        %475 = vmatprep.subr.bf16.mxu0 0
        %476 = vmatpush1.bf16.msra.mxu0 0
        %477 = vmatprep.subr.bf16.mxu0 0
        %478 = vmatpush1.bf16.msra.mxu0 0
        %479 = vmatprep.subr.bf16.mxu0 0
        %480 = vmatpush1.bf16.msra.mxu0 0
        %481 = vmatprep.subr.bf16.mxu0 0
        %482 = vmatpush1.bf16.msra.mxu0 0
        %483 = vmatprep.subr.bf16.mxu0 %v469
        %484 = vmatpush1.bf16.msra.mxu0 %v466
        %485 = vmatprep.subr.bf16.mxu0 %v449
        %486 = vmatpush1.bf16.msra.mxu0 %v448
        %487 = vmatprep.subr.bf16.mxu0 0
        %488 = vmatpush2.bf16.msra.mxu0 0
        %489 = vmatprep.subr.bf16.mxu0 0
        %490 = vmatpush2.bf16.msra.mxu0 0
        %491 = vmatprep.subr.bf16.mxu0 0
        %492 = vmatpush2.bf16.msra.mxu0 0
        %493 = vmatprep.subr.bf16.mxu0 0
        %494 = vmatpush2.bf16.msra.mxu0 0
        %495 = vmatprep.subr.bf16.mxu0 0
        %496 = vmatpush2.bf16.msra.mxu0 0
        %497 = vmatprep.subr.bf16.mxu0 0
        %498 = vmatpush2.bf16.msra.mxu0 0
        %499 = vmatprep.subr.bf16.mxu0 0
        %500 = vmatpush2.bf16.msra.mxu0 0
        %501 = vmatprep.subr.bf16.mxu0 0
        %502 = vmatpush2.bf16.msra.mxu0 0
        %503 = vmatprep.mubr.bf16.mxu0 0
        %504 = vmatmul.mubr.bf16.gmra.mxu0 %v456
        %v505 = vpop.f32.mrf.mxu0
        %v506 = vadd.f32 %v417, %v505
        %v507 = vpop.f32.mrf.mxu0
        %v508 = vadd.f32 %v421, %v507
        %v509 = vpop.f32.mrf.mxu0
        %v510 = vadd.f32 %v417, %v509
        %v511 = vpop.f32.mrf.mxu0
        %v512 = vadd.f32 %v421, %v511
        %513 = vmatprep.mubr.bf16.mxu0 0
        %514 = vmatmul.mubr.bf16.gmra.mxu0 %v459
        %v515 = vpop.f32.mrf.mxu0
        %v516 = vadd.f32 %v417, %v515
        %v517 = vpop.f32.mrf.mxu0
        %v518 = vadd.f32 %v421, %v517
        %v519 = vpop.f32.mrf.mxu0
        %v520 = vadd.f32 %v417, %v519
        %v521 = vpop.f32.mrf.mxu0
        %v522 = vadd.f32 %v421, %v521
        %523 = vmatprep.mubr.bf16.mxu0 0
        %524 = vmatmul.mubr.bf16.gmra.mxu0 %v462
        %v525 = vpop.f32.mrf.mxu0
        %v526 = vadd.f32 %v417, %v525
        %v527 = vpop.f32.mrf.mxu0
        %v528 = vadd.f32 %v421, %v527
        %v529 = vpop.f32.mrf.mxu0
        %v530 = vadd.f32 %v417, %v529
        %v531 = vpop.f32.mrf.mxu0
        %v532 = vadd.f32 %v421, %v531
        %533 = vdwg.mxu0
        %v534 = vmax.f32 %v506, 0.0
        %v535 = vmax.f32 %v508, 0.0
        %v536 = vmax.f32 %v510, 0.0
        %v537 = vmax.f32 %v512, 0.0
        %v538 = vmax.f32 %v516, 0.0
        %v539 = vmax.f32 %v518, 0.0
        %v540 = vmax.f32 %v520, 0.0
        %v541 = vmax.f32 %v522, 0.0
        %v542 = vmax.f32 %v526, 0.0
        %v543 = vmax.f32 %v528, 0.0
        %v544 = vmax.f32 %v530, 0.0
        %v545 = vmax.f32 %v532, 0.0
        %vm558 = vcmask 1046528
        %v559 = vrot.slane %v534, 1
        %v560 = vrot.slane %v536, 1
        %v561 = vsel %vm558, %v559, %v560
        %v562 = vrot.slane %v535, 1
        %v563 = vrot.slane %v537, 1
        %v564 = vsel %vm558, %v562, %v563
        %v565 = vrot.slane %v538, 1
        %v566 = vsel %vm558, %v560, %v565
        %v567 = vrot.slane %v539, 1
        %v568 = vsel %vm558, %v563, %v567
        %v569 = vrot.slane %v540, 1
        %v570 = vsel %vm558, %v565, %v569
        %v571 = vrot.slane %v541, 1
        %v572 = vsel %vm558, %v567, %v571
        %v573 = vrot.slane %v542, 1
        %v574 = vsel %vm558, %v569, %v573
        %v575 = vrot.slane %v543, 1
        %v576 = vsel %vm558, %v571, %v575
        %v577 = vrot.slane %v544, 1
        %v578 = vsel %vm558, %v573, %v577
        %v579 = vrot.slane %v545, 1
        %v580 = vsel %vm558, %v575, %v579
        %v593 = vpack.c.bf16 %v536, %v534
        %v594 = vpack.c.bf16 %v537, %v535
        %v595 = vpack.c.bf16 %v566, %v561
        %v596 = vpack.c.bf16 %v568, %v564
        %v597 = vpack.c.bf16 %v540, %v538
        %v598 = vpack.c.bf16 %v541, %v539
        %v599 = vpack.c.bf16 %v574, %v570
        %v600 = vpack.c.bf16 %v576, %v572
        %v601 = vpack.c.bf16 %v544, %v542
        %v602 = vpack.c.bf16 %v545, %v543
        %v603 = vpack.c.bf16 %v577, %v578
        %v604 = vpack.c.bf16 %v579, %v580
        %v605 = vld [vmem:[#allocation2] sm:$0xff]
        %v606 = vld [vmem:[#allocation2 + $0x8] sm:$0xff]
        %v607 = vld [vmem:[#allocation2 + $0x10] sm:$0xff]
        %v608 = vld [vmem:[#allocation2 + $0x18] sm:$0xff]
        %v609 = vld [vmem:[#allocation2 + $0x20] sm:$0xff]
        %v610 = vld [vmem:[#allocation2 + $0x28] sm:$0xff]
        %v611 = vld [vmem:[#allocation2 + $0x30] sm:$0xff]
        %v612 = vld [vmem:[#allocation2 + $0x38] sm:$0xff]
        %v613 = vld [vmem:[#allocation2 + $0x40] sm:$0xff]
        %v614 = vld [vmem:[#allocation2 + $0x48] sm:$0xff]
        %v615 = vld [vmem:[#allocation2 + $0x50] sm:$0xff]
        %v616 = vld [vmem:[#allocation2 + $0x58] sm:$0xff]
        %v617 = vld [vmem:[#allocation2 + $0x60] sm:$0xff]
        %v618 = vld [vmem:[#allocation2 + $0x68] sm:$0xff]
        %v619 = vld [vmem:[#allocation2 + $0x70] sm:$0xff]
        %v620 = vld [vmem:[#allocation2 + $0x78] sm:$0xff]
        %v621 = vld [vmem:[#allocation2 + $0x80] sm:$0xff]
        %v622 = vld [vmem:[#allocation2 + $0x88] sm:$0xff]
        %v623 = vld [vmem:[#allocation2 + $0x90] sm:$0xff]
        %v624 = vld [vmem:[#allocation2 + $0x98] sm:$0xff]
        %v625 = vld [vmem:[#allocation2 + $0xa0] sm:$0xff]
        %v626 = vld [vmem:[#allocation2 + $0xa8] sm:$0xff]
        %v627 = vld [vmem:[#allocation2 + $0xb0] sm:$0xff]
        %v628 = vld [vmem:[#allocation2 + $0xb8] sm:$0xff]
        %v629 = vld [vmem:[#allocation2 + $0xc0] sm:$0xff]
        %v630 = vld [vmem:[#allocation2 + $0xc8] sm:$0xff]
        %v631 = vld [vmem:[#allocation2 + $0xd0] sm:$0xff]
        %v632 = vld [vmem:[#allocation2 + $0xd8] sm:$0xff]
        %v633 = vld [vmem:[#allocation2 + $0xe0] sm:$0xff]
        %v634 = vld [vmem:[#allocation2 + $0xe8] sm:$0xff]
        %v635 = vld [vmem:[#allocation2 + $0xf0] sm:$0xff]
        %v636 = vld [vmem:[#allocation2 + $0xf8] sm:$0xff]
        %v637 = vld [vmem:[#allocation2 + $0x100] sm:$0xff]
        %v638 = vld [vmem:[#allocation2 + $0x108] sm:$0xff]
        %v639 = vld [vmem:[#allocation2 + $0x110] sm:$0xff]
        %v640 = vld [vmem:[#allocation2 + $0x118] sm:$0xff]
        %v641 = vld [vmem:[#allocation2 + $0x120] sm:$0xff]
        %v642 = vld [vmem:[#allocation2 + $0x128] sm:$0xff]
        %v643 = vld [vmem:[#allocation2 + $0x130] sm:$0xff]
        %v644 = vld [vmem:[#allocation2 + $0x138] sm:$0xff]
        %v645 = vld [vmem:[#allocation2 + $0x140] sm:$0xff]
        %v646 = vld [vmem:[#allocation2 + $0x148] sm:$0xff]
        %v647 = vld [vmem:[#allocation2 + $0x150] sm:$0xff]
        %v648 = vld [vmem:[#allocation2 + $0x158] sm:$0xff]
        %v649 = vld [vmem:[#allocation2 + $0x160] sm:$0xff]
        %v650 = vld [vmem:[#allocation2 + $0x168] sm:$0xff]
        %v651 = vld [vmem:[#allocation2 + $0x170] sm:$0xff]
        %v652 = vld [vmem:[#allocation2 + $0x178] sm:$0xff]
        %v653 = vld [vmem:[#allocation2 + $0x180] sm:$0xff]
        %v654 = vld [vmem:[#allocation2 + $0x188] sm:$0xff]
        %v655 = vld [vmem:[#allocation2 + $0x190] sm:$0xff]
        %v656 = vld [vmem:[#allocation2 + $0x198] sm:$0xff]
        %v657 = vld [vmem:[#allocation2 + $0x1a0] sm:$0xff]
        %v658 = vld [vmem:[#allocation2 + $0x1a8] sm:$0xff]
        %v659 = vld [vmem:[#allocation2 + $0x1b0] sm:$0xff]
        %v660 = vld [vmem:[#allocation2 + $0x1b8] sm:$0xff]
        %v661 = vld [vmem:[#allocation2 + $0x1c0] sm:$0xff]
        %v662 = vld [vmem:[#allocation2 + $0x1c8] sm:$0xff]
        %v663 = vld [vmem:[#allocation2 + $0x1d0] sm:$0xff]
        %v664 = vld [vmem:[#allocation2 + $0x1d8] sm:$0xff]
        %v665 = vld [vmem:[#allocation2 + $0x1e0] sm:$0xff]
        %v666 = vld [vmem:[#allocation2 + $0x1e8] sm:$0xff]
        %v667 = vld [vmem:[#allocation2 + $0x1f0] sm:$0xff]
        %v668 = vld [vmem:[#allocation2 + $0x1f8] sm:$0xff]
        %v669 = vld [vmem:[%s5] sm:$0x3]
        %v671 = vlaneseq
        %v672 = vshrl.u32 %v671, 7
        %v673 = vsub.s32 0, %v672
        %v674 = vrot.slane %v669, %v673
        %v675 = vlaneseq
        %v676 = vshrl.u32 %v675, 7
        %v677 = vsub.s32 1, %v676
        %v678 = vrot.slane %v669, %v677
        %v745 = vunpack.c.l.b16 %v605
        %v746 = vunpack.c.h.b16 %v605
        %v747 = vunpack.c.l.b16 %v606
        %v748 = vunpack.c.h.b16 %v606
        %v749 = vunpack.c.l.b16 %v607
        %v750 = vunpack.c.h.b16 %v607
        %v751 = vunpack.c.l.b16 %v608
        %v752 = vunpack.c.h.b16 %v608
        %v753 = vunpack.c.l.b16 %v609
        %v754 = vunpack.c.h.b16 %v609
        %v755 = vunpack.c.l.b16 %v610
        %v756 = vunpack.c.h.b16 %v610
        %v757 = vunpack.c.l.b16 %v611
        %v758 = vunpack.c.h.b16 %v611
        %v759 = vunpack.c.l.b16 %v612
        %v760 = vunpack.c.h.b16 %v612
        %v761 = vunpack.c.l.b16 %v613
        %v762 = vunpack.c.h.b16 %v613
        %v763 = vunpack.c.l.b16 %v614
        %v764 = vunpack.c.h.b16 %v614
        %v765 = vunpack.c.l.b16 %v615
        %v766 = vunpack.c.h.b16 %v615
        %v767 = vunpack.c.l.b16 %v616
        %v768 = vunpack.c.h.b16 %v616
        %v769 = vunpack.c.l.b16 %v617
        %v770 = vunpack.c.h.b16 %v617
        %v771 = vunpack.c.l.b16 %v618
        %v772 = vunpack.c.h.b16 %v618
        %v773 = vunpack.c.l.b16 %v619
        %v774 = vunpack.c.h.b16 %v619
        %v775 = vunpack.c.l.b16 %v620
        %v776 = vunpack.c.h.b16 %v620
        %v777 = vunpack.c.l.b16 %v621
        %v778 = vunpack.c.h.b16 %v621
        %v779 = vunpack.c.l.b16 %v622
        %v780 = vunpack.c.h.b16 %v622
        %v781 = vunpack.c.l.b16 %v623
        %v782 = vunpack.c.h.b16 %v623
        %v783 = vunpack.c.l.b16 %v624
        %v784 = vunpack.c.h.b16 %v624
        %v785 = vunpack.c.l.b16 %v625
        %v786 = vunpack.c.h.b16 %v625
        %v787 = vunpack.c.l.b16 %v626
        %v788 = vunpack.c.h.b16 %v626
        %v789 = vunpack.c.l.b16 %v627
        %v790 = vunpack.c.h.b16 %v627
        %v791 = vunpack.c.l.b16 %v628
        %v792 = vunpack.c.h.b16 %v628
        %v793 = vunpack.c.l.b16 %v629
        %v794 = vunpack.c.h.b16 %v629
        %v795 = vunpack.c.l.b16 %v630
        %v796 = vunpack.c.h.b16 %v630
        %v797 = vunpack.c.l.b16 %v631
        %v798 = vunpack.c.h.b16 %v631
        %v799 = vunpack.c.l.b16 %v632
        %v800 = vunpack.c.h.b16 %v632
        %v801 = vunpack.c.l.b16 %v633
        %v802 = vunpack.c.h.b16 %v633
        %v803 = vunpack.c.l.b16 %v634
        %v804 = vunpack.c.h.b16 %v634
        %v805 = vunpack.c.l.b16 %v635
        %v806 = vunpack.c.h.b16 %v635
        %v807 = vunpack.c.l.b16 %v636
        %v808 = vunpack.c.h.b16 %v636
        %v809 = vunpack.c.l.b16 %v637
        %v810 = vunpack.c.h.b16 %v637
        %v811 = vunpack.c.l.b16 %v638
        %v812 = vunpack.c.h.b16 %v638
        %v813 = vunpack.c.l.b16 %v639
        %v814 = vunpack.c.h.b16 %v639
        %v815 = vunpack.c.l.b16 %v640
        %v816 = vunpack.c.h.b16 %v640
        %v817 = vunpack.c.l.b16 %v641
        %v818 = vunpack.c.h.b16 %v641
        %v819 = vunpack.c.l.b16 %v642
        %v820 = vunpack.c.h.b16 %v642
        %v821 = vunpack.c.l.b16 %v643
        %v822 = vunpack.c.h.b16 %v643
        %v823 = vunpack.c.l.b16 %v644
        %v824 = vunpack.c.h.b16 %v644
        %v825 = vunpack.c.l.b16 %v645
        %v826 = vunpack.c.h.b16 %v645
        %v827 = vunpack.c.l.b16 %v646
        %v828 = vunpack.c.h.b16 %v646
        %v829 = vunpack.c.l.b16 %v647
        %v830 = vunpack.c.h.b16 %v647
        %v831 = vunpack.c.l.b16 %v648
        %v832 = vunpack.c.h.b16 %v648
        %v833 = vunpack.c.l.b16 %v649
        %v834 = vunpack.c.h.b16 %v649
        %v835 = vunpack.c.l.b16 %v650
        %v836 = vunpack.c.h.b16 %v650
        %v837 = vunpack.c.l.b16 %v651
        %v838 = vunpack.c.h.b16 %v651
        %v839 = vunpack.c.l.b16 %v652
        %v840 = vunpack.c.h.b16 %v652
        %v841 = vunpack.c.l.b16 %v653
        %v842 = vunpack.c.h.b16 %v653
        %v843 = vunpack.c.l.b16 %v654
        %v844 = vunpack.c.h.b16 %v654
        %v845 = vunpack.c.l.b16 %v655
        %v846 = vunpack.c.h.b16 %v655
        %v847 = vunpack.c.l.b16 %v656
        %v848 = vunpack.c.h.b16 %v656
        %v849 = vunpack.c.l.b16 %v657
        %v850 = vunpack.c.h.b16 %v657
        %v851 = vunpack.c.l.b16 %v658
        %v852 = vunpack.c.h.b16 %v658
        %v853 = vunpack.c.l.b16 %v659
        %v854 = vunpack.c.h.b16 %v659
        %v855 = vunpack.c.l.b16 %v660
        %v856 = vunpack.c.h.b16 %v660
        %v857 = vunpack.c.l.b16 %v661
        %v858 = vunpack.c.h.b16 %v661
        %v859 = vunpack.c.l.b16 %v662
        %v860 = vunpack.c.h.b16 %v662
        %v861 = vunpack.c.l.b16 %v663
        %v862 = vunpack.c.h.b16 %v663
        %v863 = vunpack.c.l.b16 %v664
        %v864 = vunpack.c.h.b16 %v664
        %v865 = vunpack.c.l.b16 %v665
        %v866 = vunpack.c.h.b16 %v665
        %v867 = vunpack.c.l.b16 %v666
        %v868 = vunpack.c.h.b16 %v666
        %v869 = vunpack.c.l.b16 %v667
        %v870 = vunpack.c.h.b16 %v667
        %v871 = vunpack.c.l.b16 %v668
        %v872 = vunpack.c.h.b16 %v668
        %v873 = vpack.c.b16 %v747, %v745
        %v874 = vpack.c.b16 %v748, %v746
        %v875 = vpack.c.b16 %v751, %v749
        %v876 = vpack.c.b16 %v752, %v750
        %v877 = vpack.c.b16 %v755, %v753
        %v878 = vpack.c.b16 %v756, %v754
        %v879 = vpack.c.b16 %v759, %v757
        %v880 = vpack.c.b16 %v760, %v758
        %v881 = vpack.c.b16 %v763, %v761
        %v882 = vpack.c.b16 %v764, %v762
        %v883 = vpack.c.b16 %v767, %v765
        %v884 = vpack.c.b16 %v768, %v766
        %v885 = vpack.c.b16 %v771, %v769
        %v886 = vpack.c.b16 %v772, %v770
        %v887 = vpack.c.b16 %v775, %v773
        %v888 = vpack.c.b16 %v776, %v774
        %v889 = vpack.c.b16 %v779, %v777
        %v890 = vpack.c.b16 %v780, %v778
        %v891 = vpack.c.b16 %v783, %v781
        %v892 = vpack.c.b16 %v784, %v782
        %v893 = vpack.c.b16 %v787, %v785
        %v894 = vpack.c.b16 %v788, %v786
        %v895 = vpack.c.b16 %v791, %v789
        %v896 = vpack.c.b16 %v792, %v790
        %v897 = vpack.c.b16 %v795, %v793
        %v898 = vpack.c.b16 %v796, %v794
        %v899 = vpack.c.b16 %v799, %v797
        %v900 = vpack.c.b16 %v800, %v798
        %v901 = vpack.c.b16 %v803, %v801
        %v902 = vpack.c.b16 %v804, %v802
        %v903 = vpack.c.b16 %v807, %v805
        %v904 = vpack.c.b16 %v808, %v806
        %v905 = vpack.c.b16 %v811, %v809
        %v906 = vpack.c.b16 %v812, %v810
        %v907 = vpack.c.b16 %v815, %v813
        %v908 = vpack.c.b16 %v816, %v814
        %v909 = vpack.c.b16 %v819, %v817
        %v910 = vpack.c.b16 %v820, %v818
        %v911 = vpack.c.b16 %v823, %v821
        %v912 = vpack.c.b16 %v824, %v822
        %v913 = vpack.c.b16 %v827, %v825
        %v914 = vpack.c.b16 %v828, %v826
        %v915 = vpack.c.b16 %v831, %v829
        %v916 = vpack.c.b16 %v832, %v830
        %v917 = vpack.c.b16 %v835, %v833
        %v918 = vpack.c.b16 %v836, %v834
        %v919 = vpack.c.b16 %v839, %v837
        %v920 = vpack.c.b16 %v840, %v838
        %v921 = vpack.c.b16 %v843, %v841
        %v922 = vpack.c.b16 %v844, %v842
        %v923 = vpack.c.b16 %v847, %v845
        %v924 = vpack.c.b16 %v848, %v846
        %v925 = vpack.c.b16 %v851, %v849
        %v926 = vpack.c.b16 %v852, %v850
        %v927 = vpack.c.b16 %v855, %v853
        %v928 = vpack.c.b16 %v856, %v854
        %v929 = vpack.c.b16 %v859, %v857
        %v930 = vpack.c.b16 %v860, %v858
        %v931 = vpack.c.b16 %v863, %v861
        %v932 = vpack.c.b16 %v864, %v862
        %v933 = vpack.c.b16 %v867, %v865
        %v934 = vpack.c.b16 %v868, %v866
        %v935 = vpack.c.b16 %v871, %v869
        %v936 = vpack.c.b16 %v872, %v870
        %1001 = vmatprep.subr.bf16.mxu0 %v888
        %1002 = vmatpush1.bf16.msra.mxu0 %v887
        %1003 = vmatprep.subr.bf16.mxu0 %v886
        %1004 = vmatpush1.bf16.msra.mxu0 %v885
        %1005 = vmatprep.subr.bf16.mxu0 %v884
        %1006 = vmatpush1.bf16.msra.mxu0 %v883
        %1007 = vmatprep.subr.bf16.mxu0 %v882
        %1008 = vmatpush1.bf16.msra.mxu0 %v881
        %1009 = vmatprep.subr.bf16.mxu0 %v880
        %1010 = vmatpush1.bf16.msra.mxu0 %v879
        %1011 = vmatprep.subr.bf16.mxu0 %v878
        %1012 = vmatpush1.bf16.msra.mxu0 %v877
        %1013 = vmatprep.subr.bf16.mxu0 %v876
        %1014 = vmatpush1.bf16.msra.mxu0 %v875
        %1015 = vmatprep.subr.bf16.mxu0 %v874
        %1016 = vmatpush1.bf16.msra.mxu0 %v873
        %1017 = vmatprep.subr.bf16.mxu0 %v904
        %1018 = vmatpush2.bf16.msra.mxu0 %v903
        %1019 = vmatprep.subr.bf16.mxu0 %v902
        %1020 = vmatpush2.bf16.msra.mxu0 %v901
        %1021 = vmatprep.subr.bf16.mxu0 %v900
        %1022 = vmatpush2.bf16.msra.mxu0 %v899
        %1023 = vmatprep.subr.bf16.mxu0 %v898
        %1024 = vmatpush2.bf16.msra.mxu0 %v897
        %1025 = vmatprep.subr.bf16.mxu0 %v896
        %1026 = vmatpush2.bf16.msra.mxu0 %v895
        %1027 = vmatprep.subr.bf16.mxu0 %v894
        %1028 = vmatpush2.bf16.msra.mxu0 %v893
        %1029 = vmatprep.subr.bf16.mxu0 %v892
        %1030 = vmatpush2.bf16.msra.mxu0 %v891
        %1031 = vmatprep.subr.bf16.mxu0 %v890
        %1032 = vmatpush2.bf16.msra.mxu0 %v889
        %1033 = vmatprep.mubr.bf16.mxu0 %v594
        %1034 = vmatmul.mubr.bf16.gmra.mxu0 %v593
        %v1035 = vpop.f32.mrf.mxu0
        %v1036 = vadd.f32 %v674, %v1035
        %v1037 = vpop.f32.mrf.mxu0
        %v1038 = vadd.f32 %v678, %v1037
        %v1039 = vpop.f32.mrf.mxu0
        %v1040 = vadd.f32 %v674, %v1039
        %v1041 = vpop.f32.mrf.mxu0
        %v1042 = vadd.f32 %v678, %v1041
        %1043 = vmatprep.mubr.bf16.mxu0 %v598
        %1044 = vmatmul.mubr.bf16.gmra.mxu0 %v597
        %v1045 = vpop.f32.mrf.mxu0
        %v1046 = vadd.f32 %v674, %v1045
        %v1047 = vpop.f32.mrf.mxu0
        %v1048 = vadd.f32 %v678, %v1047
        %v1049 = vpop.f32.mrf.mxu0
        %v1050 = vadd.f32 %v674, %v1049
        %v1051 = vpop.f32.mrf.mxu0
        %v1052 = vadd.f32 %v678, %v1051
        %1053 = vmatprep.mubr.bf16.mxu0 %v602
        %1054 = vmatmul.mubr.bf16.gmra.mxu0 %v601
        %v1055 = vpop.f32.mrf.mxu0
        %v1056 = vadd.f32 %v674, %v1055
        %v1057 = vpop.f32.mrf.mxu0
        %v1058 = vadd.f32 %v678, %v1057
        %v1059 = vpop.f32.mrf.mxu0
        %v1060 = vadd.f32 %v674, %v1059
        %v1061 = vpop.f32.mrf.mxu0
        %v1062 = vadd.f32 %v678, %v1061
        %1063 = vdwg.mxu0
        %1064 = vmatprep.subr.bf16.mxu0 %v920
        %1065 = vmatpush1.bf16.msra.mxu0 %v919
        %1066 = vmatprep.subr.bf16.mxu0 %v918
        %1067 = vmatpush1.bf16.msra.mxu0 %v917
        %1068 = vmatprep.subr.bf16.mxu0 %v916
        %1069 = vmatpush1.bf16.msra.mxu0 %v915
        %1070 = vmatprep.subr.bf16.mxu0 %v914
        %1071 = vmatpush1.bf16.msra.mxu0 %v913
        %1072 = vmatprep.subr.bf16.mxu0 %v912
        %1073 = vmatpush1.bf16.msra.mxu0 %v911
        %1074 = vmatprep.subr.bf16.mxu0 %v910
        %1075 = vmatpush1.bf16.msra.mxu0 %v909
        %1076 = vmatprep.subr.bf16.mxu0 %v908
        %1077 = vmatpush1.bf16.msra.mxu0 %v907
        %1078 = vmatprep.subr.bf16.mxu0 %v906
        %1079 = vmatpush1.bf16.msra.mxu0 %v905
        %1080 = vmatprep.subr.bf16.mxu0 %v936
        %1081 = vmatpush2.bf16.msra.mxu0 %v935
        %1082 = vmatprep.subr.bf16.mxu0 %v934
        %1083 = vmatpush2.bf16.msra.mxu0 %v933
        %1084 = vmatprep.subr.bf16.mxu0 %v932
        %1085 = vmatpush2.bf16.msra.mxu0 %v931
        %1086 = vmatprep.subr.bf16.mxu0 %v930
        %1087 = vmatpush2.bf16.msra.mxu0 %v929
        %1088 = vmatprep.subr.bf16.mxu0 %v928
        %1089 = vmatpush2.bf16.msra.mxu0 %v927
        %1090 = vmatprep.subr.bf16.mxu0 %v926
        %1091 = vmatpush2.bf16.msra.mxu0 %v925
        %1092 = vmatprep.subr.bf16.mxu0 %v924
        %1093 = vmatpush2.bf16.msra.mxu0 %v923
        %1094 = vmatprep.subr.bf16.mxu0 %v922
        %1095 = vmatpush2.bf16.msra.mxu0 %v921
        %1096 = vmatprep.mubr.bf16.mxu0 %v596
        %1097 = vmatmul.mubr.bf16.gmra.mxu0 %v595
        %v1098 = vpop.f32.mrf.mxu0
        %v1099 = vadd.f32 %v1036, %v1098
        %v1100 = vpop.f32.mrf.mxu0
        %v1101 = vadd.f32 %v1038, %v1100
        %v1102 = vpop.f32.mrf.mxu0
        %v1103 = vadd.f32 %v1040, %v1102
        %v1104 = vpop.f32.mrf.mxu0
        %v1105 = vadd.f32 %v1042, %v1104
        %1106 = vmatprep.mubr.bf16.mxu0 %v600
        %1107 = vmatmul.mubr.bf16.gmra.mxu0 %v599
        %v1108 = vpop.f32.mrf.mxu0
        %v1109 = vadd.f32 %v1046, %v1108
        %v1110 = vpop.f32.mrf.mxu0
        %v1111 = vadd.f32 %v1048, %v1110
        %v1112 = vpop.f32.mrf.mxu0
        %v1113 = vadd.f32 %v1050, %v1112
        %v1114 = vpop.f32.mrf.mxu0
        %v1115 = vadd.f32 %v1052, %v1114
        %1116 = vmatprep.mubr.bf16.mxu0 %v604
        %1117 = vmatmul.mubr.bf16.gmra.mxu0 %v603
        %v1118 = vpop.f32.mrf.mxu0
        %v1119 = vadd.f32 %v1056, %v1118
        %v1120 = vpop.f32.mrf.mxu0
        %v1121 = vadd.f32 %v1058, %v1120
        %v1122 = vpop.f32.mrf.mxu0
        %v1123 = vadd.f32 %v1060, %v1122
        %v1124 = vpop.f32.mrf.mxu0
        %v1125 = vadd.f32 %v1062, %v1124
        %1126 = vdwg.mxu0
        %v1127 = vmax.f32 %v1099, 0.0
        %v1128 = vmax.f32 %v1101, 0.0
        %v1129 = vmax.f32 %v1103, 0.0
        %v1130 = vmax.f32 %v1105, 0.0
        %v1131 = vmax.f32 %v1109, 0.0
        %v1132 = vmax.f32 %v1111, 0.0
        %v1133 = vmax.f32 %v1113, 0.0
        %v1134 = vmax.f32 %v1115, 0.0
        %v1135 = vmax.f32 %v1119, 0.0
        %v1136 = vmax.f32 %v1121, 0.0
        %v1137 = vmax.f32 %v1123, 0.0
        %v1138 = vmax.f32 %v1125, 0.0
        %v1151 = vrot.slane %v1127, 1
        %v1152 = vrot.slane %v1129, 1
        %v1153 = vsel %vm558, %v1151, %v1152
        %v1154 = vrot.slane %v1128, 1
        %v1155 = vrot.slane %v1130, 1
        %v1156 = vsel %vm558, %v1154, %v1155
        %v1157 = vrot.slane %v1131, 1
        %v1158 = vsel %vm558, %v1152, %v1157
        %v1159 = vrot.slane %v1132, 1
        %v1160 = vsel %vm558, %v1155, %v1159
        %v1161 = vrot.slane %v1133, 1
        %v1162 = vsel %vm558, %v1157, %v1161
        %v1163 = vrot.slane %v1134, 1
        %v1164 = vsel %vm558, %v1159, %v1163
        %v1165 = vrot.slane %v1135, 1
        %v1166 = vsel %vm558, %v1161, %v1165
        %v1167 = vrot.slane %v1136, 1
        %v1168 = vsel %vm558, %v1163, %v1167
        %v1169 = vrot.slane %v1137, 1
        %v1170 = vsel %vm558, %v1165, %v1169
        %v1171 = vrot.slane %v1138, 1
        %v1172 = vsel %vm558, %v1167, %v1171
        %vm1185 = vcmask 1045504
        %v1186 = vrot.slane %v1127, 2
        %v1187 = vrot.slane %v1129, 2
        %v1188 = vsel %vm1185, %v1186, %v1187
        %v1189 = vrot.slane %v1131, 2
        %v1190 = vsel %vm1185, %v1187, %v1189
        %v1191 = vrot.slane %v1133, 2
        %v1192 = vsel %vm1185, %v1189, %v1191
        %v1193 = vrot.slane %v1135, 2
        %v1194 = vsel %vm1185, %v1191, %v1193
        %v1195 = vrot.slane %v1137, 2
        %v1196 = vsel %vm1185, %v1193, %v1195
        %v1203 = vpack.c.bf16 %v1129, %v1127
        %v1204 = vpack.c.bf16 %v1130, %v1128
        %v1205 = vpack.c.bf16 %v1158, %v1153
        %v1206 = vpack.c.bf16 %v1160, %v1156
        %v1207 = vpack.c.bf16 %v1190, %v1188
        %v1208 = vpack.c.bf16 %v1133, %v1131
        %v1209 = vpack.c.bf16 %v1134, %v1132
        %v1210 = vpack.c.bf16 %v1166, %v1162
        %v1211 = vpack.c.bf16 %v1168, %v1164
        %v1212 = vpack.c.bf16 %v1194, %v1192
        %v1213 = vpack.c.bf16 %v1137, %v1135
        %v1214 = vpack.c.bf16 %v1138, %v1136
        %v1215 = vpack.c.bf16 %v1169, %v1170
        %v1216 = vpack.c.bf16 %v1171, %v1172
        %v1217 = vpack.c.bf16 %v1195, %v1196
        %v1218 = vld [vmem:[#allocation5] sm:$0xff]
        %v1219 = vld [vmem:[#allocation5 + $0x8] sm:$0xff]
        %v1220 = vld [vmem:[#allocation5 + $0x10] sm:$0xff]
        %v1221 = vld [vmem:[#allocation5 + $0x18] sm:$0xff]
        %v1222 = vld [vmem:[#allocation5 + $0x20] sm:$0xff]
        %v1223 = vld [vmem:[#allocation5 + $0x28] sm:$0xff]
        %v1224 = vld [vmem:[#allocation5 + $0x30] sm:$0xff]
        %v1225 = vld [vmem:[#allocation5 + $0x38] sm:$0xff]
        %v1226 = vld [vmem:[#allocation5 + $0x40] sm:$0xff]
        %v1227 = vld [vmem:[#allocation5 + $0x48] sm:$0xff]
        %v1228 = vld [vmem:[#allocation5 + $0x50] sm:$0xff]
        %v1229 = vld [vmem:[#allocation5 + $0x58] sm:$0xff]
        %v1230 = vld [vmem:[#allocation5 + $0x60] sm:$0xff]
        %v1231 = vld [vmem:[#allocation5 + $0x68] sm:$0xff]
        %v1232 = vld [vmem:[#allocation5 + $0x70] sm:$0xff]
        %v1233 = vld [vmem:[#allocation5 + $0x78] sm:$0xff]
        %v1234 = vld [vmem:[#allocation5 + $0x80] sm:$0xff]
        %v1235 = vld [vmem:[#allocation5 + $0x88] sm:$0xff]
        %v1236 = vld [vmem:[#allocation5 + $0x90] sm:$0xff]
        %v1237 = vld [vmem:[#allocation5 + $0x98] sm:$0xff]
        %v1238 = vld [vmem:[#allocation5 + $0xa0] sm:$0xff]
        %v1239 = vld [vmem:[#allocation5 + $0xa8] sm:$0xff]
        %v1240 = vld [vmem:[#allocation5 + $0xb0] sm:$0xff]
        %v1241 = vld [vmem:[#allocation5 + $0xb8] sm:$0xff]
        %v1242 = vld [vmem:[#allocation5 + $0xc0] sm:$0xff]
        %v1243 = vld [vmem:[#allocation5 + $0xc8] sm:$0xff]
        %v1244 = vld [vmem:[#allocation5 + $0xd0] sm:$0xff]
        %v1245 = vld [vmem:[#allocation5 + $0xd8] sm:$0xff]
        %v1246 = vld [vmem:[#allocation5 + $0xe0] sm:$0xff]
        %v1247 = vld [vmem:[#allocation5 + $0xe8] sm:$0xff]
        %v1248 = vld [vmem:[#allocation5 + $0xf0] sm:$0xff]
        %v1249 = vld [vmem:[#allocation5 + $0xf8] sm:$0xff]
        %v1250 = vld [vmem:[#allocation5 + $0x100] sm:$0xff]
        %v1251 = vld [vmem:[#allocation5 + $0x108] sm:$0xff]
        %v1252 = vld [vmem:[#allocation5 + $0x110] sm:$0xff]
        %v1253 = vld [vmem:[#allocation5 + $0x118] sm:$0xff]
        %v1254 = vld [vmem:[#allocation5 + $0x120] sm:$0xff]
        %v1255 = vld [vmem:[#allocation5 + $0x128] sm:$0xff]
        %v1256 = vld [vmem:[#allocation5 + $0x130] sm:$0xff]
        %v1257 = vld [vmem:[#allocation5 + $0x138] sm:$0xff]
        %v1258 = vld [vmem:[#allocation5 + $0x140] sm:$0xff]
        %v1259 = vld [vmem:[#allocation5 + $0x148] sm:$0xff]
        %v1260 = vld [vmem:[#allocation5 + $0x150] sm:$0xff]
        %v1261 = vld [vmem:[#allocation5 + $0x158] sm:$0xff]
        %v1262 = vld [vmem:[#allocation5 + $0x160] sm:$0xff]
        %v1263 = vld [vmem:[#allocation5 + $0x168] sm:$0xff]
        %v1264 = vld [vmem:[#allocation5 + $0x170] sm:$0xff]
        %v1265 = vld [vmem:[#allocation5 + $0x178] sm:$0xff]
        %v1266 = vld [vmem:[#allocation5 + $0x180] sm:$0xff]
        %v1267 = vld [vmem:[#allocation5 + $0x188] sm:$0xff]
        %v1268 = vld [vmem:[#allocation5 + $0x190] sm:$0xff]
        %v1269 = vld [vmem:[#allocation5 + $0x198] sm:$0xff]
        %v1270 = vld [vmem:[#allocation5 + $0x1a0] sm:$0xff]
        %v1271 = vld [vmem:[#allocation5 + $0x1a8] sm:$0xff]
        %v1272 = vld [vmem:[#allocation5 + $0x1b0] sm:$0xff]
        %v1273 = vld [vmem:[#allocation5 + $0x1b8] sm:$0xff]
        %v1274 = vld [vmem:[#allocation5 + $0x1c0] sm:$0xff]
        %v1275 = vld [vmem:[#allocation5 + $0x1c8] sm:$0xff]
        %v1276 = vld [vmem:[#allocation5 + $0x1d0] sm:$0xff]
        %v1277 = vld [vmem:[#allocation5 + $0x1d8] sm:$0xff]
        %v1278 = vld [vmem:[#allocation5 + $0x1e0] sm:$0xff]
        %v1279 = vld [vmem:[#allocation5 + $0x1e8] sm:$0xff]
        %v1280 = vld [vmem:[#allocation5 + $0x1f0] sm:$0xff]
        %v1281 = vld [vmem:[#allocation5 + $0x1f8] sm:$0xff]
        %v1282 = vld [vmem:[#allocation5 + $0x200] sm:$0xff]
        %v1283 = vld [vmem:[#allocation5 + $0x208] sm:$0xff]
        %v1284 = vld [vmem:[#allocation5 + $0x210] sm:$0xff]
        %v1285 = vld [vmem:[#allocation5 + $0x218] sm:$0xff]
        %v1286 = vld [vmem:[#allocation5 + $0x220] sm:$0xff]
        %v1287 = vld [vmem:[#allocation5 + $0x228] sm:$0xff]
        %v1288 = vld [vmem:[#allocation5 + $0x230] sm:$0xff]
        %v1289 = vld [vmem:[#allocation5 + $0x238] sm:$0xff]
        %v1290 = vld [vmem:[#allocation5 + $0x240] sm:$0xff]
        %v1291 = vld [vmem:[#allocation5 + $0x248] sm:$0xff]
        %v1292 = vld [vmem:[#allocation5 + $0x250] sm:$0xff]
        %v1293 = vld [vmem:[#allocation5 + $0x258] sm:$0xff]
        %v1294 = vld [vmem:[#allocation5 + $0x260] sm:$0xff]
        %v1295 = vld [vmem:[#allocation5 + $0x268] sm:$0xff]
        %v1296 = vld [vmem:[#allocation5 + $0x270] sm:$0xff]
        %v1297 = vld [vmem:[#allocation5 + $0x278] sm:$0xff]
        %v1298 = vld [vmem:[%s7] sm:$0x3]
        %v1300 = vlaneseq
        %v1301 = vshrl.u32 %v1300, 7
        %v1302 = vsub.s32 0, %v1301
        %v1303 = vrot.slane %v1298, %v1302
        %v1304 = vlaneseq
        %v1305 = vshrl.u32 %v1304, 7
        %v1306 = vsub.s32 1, %v1305
        %v1307 = vrot.slane %v1298, %v1306
        %v1390 = vunpack.c.l.b16 %v1218
        %v1391 = vunpack.c.h.b16 %v1218
        %v1392 = vunpack.c.l.b16 %v1219
        %v1393 = vunpack.c.h.b16 %v1219
        %v1394 = vunpack.c.l.b16 %v1220
        %v1395 = vunpack.c.h.b16 %v1220
        %v1396 = vunpack.c.l.b16 %v1221
        %v1397 = vunpack.c.h.b16 %v1221
        %v1398 = vunpack.c.l.b16 %v1222
        %v1399 = vunpack.c.h.b16 %v1222
        %v1400 = vunpack.c.l.b16 %v1223
        %v1401 = vunpack.c.h.b16 %v1223
        %v1402 = vunpack.c.l.b16 %v1224
        %v1403 = vunpack.c.h.b16 %v1224
        %v1404 = vunpack.c.l.b16 %v1225
        %v1405 = vunpack.c.h.b16 %v1225
        %v1406 = vunpack.c.l.b16 %v1226
        %v1407 = vunpack.c.h.b16 %v1226
        %v1408 = vunpack.c.l.b16 %v1227
        %v1409 = vunpack.c.h.b16 %v1227
        %v1410 = vunpack.c.l.b16 %v1228
        %v1411 = vunpack.c.h.b16 %v1228
        %v1412 = vunpack.c.l.b16 %v1229
        %v1413 = vunpack.c.h.b16 %v1229
        %v1414 = vunpack.c.l.b16 %v1230
        %v1415 = vunpack.c.h.b16 %v1230
        %v1416 = vunpack.c.l.b16 %v1231
        %v1417 = vunpack.c.h.b16 %v1231
        %v1418 = vunpack.c.l.b16 %v1232
        %v1419 = vunpack.c.h.b16 %v1232
        %v1420 = vunpack.c.l.b16 %v1233
        %v1421 = vunpack.c.h.b16 %v1233
        %v1422 = vunpack.c.l.b16 %v1234
        %v1423 = vunpack.c.h.b16 %v1234
        %v1424 = vunpack.c.l.b16 %v1235
        %v1425 = vunpack.c.h.b16 %v1235
        %v1426 = vunpack.c.l.b16 %v1236
        %v1427 = vunpack.c.h.b16 %v1236
        %v1428 = vunpack.c.l.b16 %v1237
        %v1429 = vunpack.c.h.b16 %v1237
        %v1430 = vunpack.c.l.b16 %v1238
        %v1431 = vunpack.c.h.b16 %v1238
        %v1432 = vunpack.c.l.b16 %v1239
        %v1433 = vunpack.c.h.b16 %v1239
        %v1434 = vunpack.c.l.b16 %v1240
        %v1435 = vunpack.c.h.b16 %v1240
        %v1436 = vunpack.c.l.b16 %v1241
        %v1437 = vunpack.c.h.b16 %v1241
        %v1438 = vunpack.c.l.b16 %v1242
        %v1439 = vunpack.c.h.b16 %v1242
        %v1440 = vunpack.c.l.b16 %v1243
        %v1441 = vunpack.c.h.b16 %v1243
        %v1442 = vunpack.c.l.b16 %v1244
        %v1443 = vunpack.c.h.b16 %v1244
        %v1444 = vunpack.c.l.b16 %v1245
        %v1445 = vunpack.c.h.b16 %v1245
        %v1446 = vunpack.c.l.b16 %v1246
        %v1447 = vunpack.c.h.b16 %v1246
        %v1448 = vunpack.c.l.b16 %v1247
        %v1449 = vunpack.c.h.b16 %v1247
        %v1450 = vunpack.c.l.b16 %v1248
        %v1451 = vunpack.c.h.b16 %v1248
        %v1452 = vunpack.c.l.b16 %v1249
        %v1453 = vunpack.c.h.b16 %v1249
        %v1454 = vunpack.c.l.b16 %v1250
        %v1455 = vunpack.c.h.b16 %v1250
        %v1456 = vunpack.c.l.b16 %v1251
        %v1457 = vunpack.c.h.b16 %v1251
        %v1458 = vunpack.c.l.b16 %v1252
        %v1459 = vunpack.c.h.b16 %v1252
        %v1460 = vunpack.c.l.b16 %v1253
        %v1461 = vunpack.c.h.b16 %v1253
        %v1462 = vunpack.c.l.b16 %v1254
        %v1463 = vunpack.c.h.b16 %v1254
        %v1464 = vunpack.c.l.b16 %v1255
        %v1465 = vunpack.c.h.b16 %v1255
        %v1466 = vunpack.c.l.b16 %v1256
        %v1467 = vunpack.c.h.b16 %v1256
        %v1468 = vunpack.c.l.b16 %v1257
        %v1469 = vunpack.c.h.b16 %v1257
        %v1470 = vunpack.c.l.b16 %v1258
        %v1471 = vunpack.c.h.b16 %v1258
        %v1472 = vunpack.c.l.b16 %v1259
        %v1473 = vunpack.c.h.b16 %v1259
        %v1474 = vunpack.c.l.b16 %v1260
        %v1475 = vunpack.c.h.b16 %v1260
        %v1476 = vunpack.c.l.b16 %v1261
        %v1477 = vunpack.c.h.b16 %v1261
        %v1478 = vunpack.c.l.b16 %v1262
        %v1479 = vunpack.c.h.b16 %v1262
        %v1480 = vunpack.c.l.b16 %v1263
        %v1481 = vunpack.c.h.b16 %v1263
        %v1482 = vunpack.c.l.b16 %v1264
        %v1483 = vunpack.c.h.b16 %v1264
        %v1484 = vunpack.c.l.b16 %v1265
        %v1485 = vunpack.c.h.b16 %v1265
        %v1486 = vunpack.c.l.b16 %v1266
        %v1487 = vunpack.c.h.b16 %v1266
        %v1488 = vunpack.c.l.b16 %v1267
        %v1489 = vunpack.c.h.b16 %v1267
        %v1490 = vunpack.c.l.b16 %v1268
        %v1491 = vunpack.c.h.b16 %v1268
        %v1492 = vunpack.c.l.b16 %v1269
        %v1493 = vunpack.c.h.b16 %v1269
        %v1494 = vunpack.c.l.b16 %v1270
        %v1495 = vunpack.c.h.b16 %v1270
        %v1496 = vunpack.c.l.b16 %v1271
        %v1497 = vunpack.c.h.b16 %v1271
        %v1498 = vunpack.c.l.b16 %v1272
        %v1499 = vunpack.c.h.b16 %v1272
        %v1500 = vunpack.c.l.b16 %v1273
        %v1501 = vunpack.c.h.b16 %v1273
        %v1502 = vunpack.c.l.b16 %v1274
        %v1503 = vunpack.c.h.b16 %v1274
        %v1504 = vunpack.c.l.b16 %v1275
        %v1505 = vunpack.c.h.b16 %v1275
        %v1506 = vunpack.c.l.b16 %v1276
        %v1507 = vunpack.c.h.b16 %v1276
        %v1508 = vunpack.c.l.b16 %v1277
        %v1509 = vunpack.c.h.b16 %v1277
        %v1510 = vunpack.c.l.b16 %v1278
        %v1511 = vunpack.c.h.b16 %v1278
        %v1512 = vunpack.c.l.b16 %v1279
        %v1513 = vunpack.c.h.b16 %v1279
        %v1514 = vunpack.c.l.b16 %v1280
        %v1515 = vunpack.c.h.b16 %v1280
        %v1516 = vunpack.c.l.b16 %v1281
        %v1517 = vunpack.c.h.b16 %v1281
        %v1518 = vunpack.c.l.b16 %v1282
        %v1519 = vunpack.c.h.b16 %v1282
        %v1520 = vunpack.c.l.b16 %v1283
        %v1521 = vunpack.c.h.b16 %v1283
        %v1522 = vunpack.c.l.b16 %v1284
        %v1523 = vunpack.c.h.b16 %v1284
        %v1524 = vunpack.c.l.b16 %v1285
        %v1525 = vunpack.c.h.b16 %v1285
        %v1526 = vunpack.c.l.b16 %v1286
        %v1527 = vunpack.c.h.b16 %v1286
        %v1528 = vunpack.c.l.b16 %v1287
        %v1529 = vunpack.c.h.b16 %v1287
        %v1530 = vunpack.c.l.b16 %v1288
        %v1531 = vunpack.c.h.b16 %v1288
        %v1532 = vunpack.c.l.b16 %v1289
        %v1533 = vunpack.c.h.b16 %v1289
        %v1534 = vunpack.c.l.b16 %v1290
        %v1535 = vunpack.c.h.b16 %v1290
        %v1536 = vunpack.c.l.b16 %v1291
        %v1537 = vunpack.c.h.b16 %v1291
        %v1538 = vunpack.c.l.b16 %v1292
        %v1539 = vunpack.c.h.b16 %v1292
        %v1540 = vunpack.c.l.b16 %v1293
        %v1541 = vunpack.c.h.b16 %v1293
        %v1542 = vunpack.c.l.b16 %v1294
        %v1543 = vunpack.c.h.b16 %v1294
        %v1544 = vunpack.c.l.b16 %v1295
        %v1545 = vunpack.c.h.b16 %v1295
        %v1546 = vunpack.c.l.b16 %v1296
        %v1547 = vunpack.c.h.b16 %v1296
        %v1548 = vunpack.c.l.b16 %v1297
        %v1549 = vunpack.c.h.b16 %v1297
        %v1550 = vpack.c.b16 %v1392, %v1390
        %v1551 = vpack.c.b16 %v1393, %v1391
        %v1552 = vpack.c.b16 %v1396, %v1394
        %v1553 = vpack.c.b16 %v1397, %v1395
        %v1554 = vpack.c.b16 %v1400, %v1398
        %v1555 = vpack.c.b16 %v1401, %v1399
        %v1556 = vpack.c.b16 %v1404, %v1402
        %v1557 = vpack.c.b16 %v1405, %v1403
        %v1558 = vpack.c.b16 %v1408, %v1406
        %v1559 = vpack.c.b16 %v1409, %v1407
        %v1560 = vpack.c.b16 %v1412, %v1410
        %v1561 = vpack.c.b16 %v1413, %v1411
        %v1562 = vpack.c.b16 %v1416, %v1414
        %v1563 = vpack.c.b16 %v1417, %v1415
        %v1564 = vpack.c.b16 %v1420, %v1418
        %v1565 = vpack.c.b16 %v1421, %v1419
        %v1566 = vpack.c.b16 %v1424, %v1422
        %v1567 = vpack.c.b16 %v1425, %v1423
        %v1568 = vpack.c.b16 %v1428, %v1426
        %v1569 = vpack.c.b16 %v1429, %v1427
        %v1570 = vpack.c.b16 %v1432, %v1430
        %v1571 = vpack.c.b16 %v1433, %v1431
        %v1572 = vpack.c.b16 %v1436, %v1434
        %v1573 = vpack.c.b16 %v1437, %v1435
        %v1574 = vpack.c.b16 %v1440, %v1438
        %v1575 = vpack.c.b16 %v1441, %v1439
        %v1576 = vpack.c.b16 %v1444, %v1442
        %v1577 = vpack.c.b16 %v1445, %v1443
        %v1578 = vpack.c.b16 %v1448, %v1446
        %v1579 = vpack.c.b16 %v1449, %v1447
        %v1580 = vpack.c.b16 %v1452, %v1450
        %v1581 = vpack.c.b16 %v1453, %v1451
        %v1582 = vpack.c.b16 %v1456, %v1454
        %v1583 = vpack.c.b16 %v1457, %v1455
        %v1584 = vpack.c.b16 %v1460, %v1458
        %v1585 = vpack.c.b16 %v1461, %v1459
        %v1586 = vpack.c.b16 %v1464, %v1462
        %v1587 = vpack.c.b16 %v1465, %v1463
        %v1588 = vpack.c.b16 %v1468, %v1466
        %v1589 = vpack.c.b16 %v1469, %v1467
        %v1590 = vpack.c.b16 %v1472, %v1470
        %v1591 = vpack.c.b16 %v1473, %v1471
        %v1592 = vpack.c.b16 %v1476, %v1474
        %v1593 = vpack.c.b16 %v1477, %v1475
        %v1594 = vpack.c.b16 %v1480, %v1478
        %v1595 = vpack.c.b16 %v1481, %v1479
        %v1596 = vpack.c.b16 %v1484, %v1482
        %v1597 = vpack.c.b16 %v1485, %v1483
        %v1598 = vpack.c.b16 %v1488, %v1486
        %v1599 = vpack.c.b16 %v1489, %v1487
        %v1600 = vpack.c.b16 %v1492, %v1490
        %v1601 = vpack.c.b16 %v1493, %v1491
        %v1602 = vpack.c.b16 %v1496, %v1494
        %v1603 = vpack.c.b16 %v1497, %v1495
        %v1604 = vpack.c.b16 %v1500, %v1498
        %v1605 = vpack.c.b16 %v1501, %v1499
        %v1606 = vpack.c.b16 %v1504, %v1502
        %v1607 = vpack.c.b16 %v1505, %v1503
        %v1608 = vpack.c.b16 %v1508, %v1506
        %v1609 = vpack.c.b16 %v1509, %v1507
        %v1610 = vpack.c.b16 %v1512, %v1510
        %v1611 = vpack.c.b16 %v1513, %v1511
        %v1612 = vpack.c.b16 %v1516, %v1514
        %v1613 = vpack.c.b16 %v1517, %v1515
        %v1614 = vpack.c.b16 %v1520, %v1518
        %v1615 = vpack.c.b16 %v1521, %v1519
        %v1616 = vpack.c.b16 %v1524, %v1522
        %v1617 = vpack.c.b16 %v1525, %v1523
        %v1618 = vpack.c.b16 %v1528, %v1526
        %v1619 = vpack.c.b16 %v1529, %v1527
        %v1620 = vpack.c.b16 %v1532, %v1530
        %v1621 = vpack.c.b16 %v1533, %v1531
        %v1622 = vpack.c.b16 %v1536, %v1534
        %v1623 = vpack.c.b16 %v1537, %v1535
        %v1624 = vpack.c.b16 %v1540, %v1538
        %v1625 = vpack.c.b16 %v1541, %v1539
        %v1626 = vpack.c.b16 %v1544, %v1542
        %v1627 = vpack.c.b16 %v1545, %v1543
        %v1628 = vpack.c.b16 %v1548, %v1546
        %v1629 = vpack.c.b16 %v1549, %v1547
        %1710 = vmatprep.subr.bf16.mxu0 %v1565
        %1711 = vmatpush1.bf16.msra.mxu0 %v1564
        %1712 = vmatprep.subr.bf16.mxu0 %v1563
        %1713 = vmatpush1.bf16.msra.mxu0 %v1562
        %1714 = vmatprep.subr.bf16.mxu0 %v1561
        %1715 = vmatpush1.bf16.msra.mxu0 %v1560
        %1716 = vmatprep.subr.bf16.mxu0 %v1559
        %1717 = vmatpush1.bf16.msra.mxu0 %v1558
        %1718 = vmatprep.subr.bf16.mxu0 %v1557
        %1719 = vmatpush1.bf16.msra.mxu0 %v1556
        %1720 = vmatprep.subr.bf16.mxu0 %v1555
        %1721 = vmatpush1.bf16.msra.mxu0 %v1554
        %1722 = vmatprep.subr.bf16.mxu0 %v1553
        %1723 = vmatpush1.bf16.msra.mxu0 %v1552
        %1724 = vmatprep.subr.bf16.mxu0 %v1551
        %1725 = vmatpush1.bf16.msra.mxu0 %v1550
        %1726 = vmatprep.subr.bf16.mxu0 %v1581
        %1727 = vmatpush2.bf16.msra.mxu0 %v1580
        %1728 = vmatprep.subr.bf16.mxu0 %v1579
        %1729 = vmatpush2.bf16.msra.mxu0 %v1578
        %1730 = vmatprep.subr.bf16.mxu0 %v1577
        %1731 = vmatpush2.bf16.msra.mxu0 %v1576
        %1732 = vmatprep.subr.bf16.mxu0 %v1575
        %1733 = vmatpush2.bf16.msra.mxu0 %v1574
        %1734 = vmatprep.subr.bf16.mxu0 %v1573
        %1735 = vmatpush2.bf16.msra.mxu0 %v1572
        %1736 = vmatprep.subr.bf16.mxu0 %v1571
        %1737 = vmatpush2.bf16.msra.mxu0 %v1570
        %1738 = vmatprep.subr.bf16.mxu0 %v1569
        %1739 = vmatpush2.bf16.msra.mxu0 %v1568
        %1740 = vmatprep.subr.bf16.mxu0 %v1567
        %1741 = vmatpush2.bf16.msra.mxu0 %v1566
        %1742 = vmatprep.mubr.bf16.mxu0 %v1204
        %1743 = vmatmul.mubr.bf16.gmra.mxu0 %v1203
        %v1744 = vpop.f32.mrf.mxu0
        %v1745 = vadd.f32 %v1303, %v1744
        %v1746 = vpop.f32.mrf.mxu0
        %v1747 = vadd.f32 %v1307, %v1746
        %v1748 = vpop.f32.mrf.mxu0
        %v1749 = vadd.f32 %v1303, %v1748
        %v1750 = vpop.f32.mrf.mxu0
        %v1751 = vadd.f32 %v1307, %v1750
        %1752 = vmatprep.mubr.bf16.mxu0 %v1209
        %1753 = vmatmul.mubr.bf16.gmra.mxu0 %v1208
        %v1754 = vpop.f32.mrf.mxu0
        %v1755 = vadd.f32 %v1303, %v1754
        %v1756 = vpop.f32.mrf.mxu0
        %v1757 = vadd.f32 %v1307, %v1756
        %v1758 = vpop.f32.mrf.mxu0
        %v1759 = vadd.f32 %v1303, %v1758
        %v1760 = vpop.f32.mrf.mxu0
        %v1761 = vadd.f32 %v1307, %v1760
        %1762 = vmatprep.mubr.bf16.mxu0 %v1214
        %1763 = vmatmul.mubr.bf16.gmra.mxu0 %v1213
        %v1764 = vpop.f32.mrf.mxu0
        %v1765 = vadd.f32 %v1303, %v1764
        %v1766 = vpop.f32.mrf.mxu0
        %v1767 = vadd.f32 %v1307, %v1766
        %v1768 = vpop.f32.mrf.mxu0
        %v1769 = vadd.f32 %v1303, %v1768
        %v1770 = vpop.f32.mrf.mxu0
        %v1771 = vadd.f32 %v1307, %v1770
        %1772 = vdwg.mxu0
        %1773 = vmatprep.subr.bf16.mxu0 %v1597
        %1774 = vmatpush1.bf16.msra.mxu0 %v1596
        %1775 = vmatprep.subr.bf16.mxu0 %v1595
        %1776 = vmatpush1.bf16.msra.mxu0 %v1594
        %1777 = vmatprep.subr.bf16.mxu0 %v1593
        %1778 = vmatpush1.bf16.msra.mxu0 %v1592
        %1779 = vmatprep.subr.bf16.mxu0 %v1591
        %1780 = vmatpush1.bf16.msra.mxu0 %v1590
        %1781 = vmatprep.subr.bf16.mxu0 %v1589
        %1782 = vmatpush1.bf16.msra.mxu0 %v1588
        %1783 = vmatprep.subr.bf16.mxu0 %v1587
        %1784 = vmatpush1.bf16.msra.mxu0 %v1586
        %1785 = vmatprep.subr.bf16.mxu0 %v1585
        %1786 = vmatpush1.bf16.msra.mxu0 %v1584
        %1787 = vmatprep.subr.bf16.mxu0 %v1583
        %1788 = vmatpush1.bf16.msra.mxu0 %v1582
        %1789 = vmatprep.subr.bf16.mxu0 %v1613
        %1790 = vmatpush2.bf16.msra.mxu0 %v1612
        %1791 = vmatprep.subr.bf16.mxu0 %v1611
        %1792 = vmatpush2.bf16.msra.mxu0 %v1610
        %1793 = vmatprep.subr.bf16.mxu0 %v1609
        %1794 = vmatpush2.bf16.msra.mxu0 %v1608
        %1795 = vmatprep.subr.bf16.mxu0 %v1607
        %1796 = vmatpush2.bf16.msra.mxu0 %v1606
        %1797 = vmatprep.subr.bf16.mxu0 %v1605
        %1798 = vmatpush2.bf16.msra.mxu0 %v1604
        %1799 = vmatprep.subr.bf16.mxu0 %v1603
        %1800 = vmatpush2.bf16.msra.mxu0 %v1602
        %1801 = vmatprep.subr.bf16.mxu0 %v1601
        %1802 = vmatpush2.bf16.msra.mxu0 %v1600
        %1803 = vmatprep.subr.bf16.mxu0 %v1599
        %1804 = vmatpush2.bf16.msra.mxu0 %v1598
        %1805 = vmatprep.mubr.bf16.mxu0 %v1206
        %1806 = vmatmul.mubr.bf16.gmra.mxu0 %v1205
        %v1807 = vpop.f32.mrf.mxu0
        %v1808 = vadd.f32 %v1745, %v1807
        %v1809 = vpop.f32.mrf.mxu0
        %v1810 = vadd.f32 %v1747, %v1809
        %v1811 = vpop.f32.mrf.mxu0
        %v1812 = vadd.f32 %v1749, %v1811
        %v1813 = vpop.f32.mrf.mxu0
        %v1814 = vadd.f32 %v1751, %v1813
        %1815 = vmatprep.mubr.bf16.mxu0 %v1211
        %1816 = vmatmul.mubr.bf16.gmra.mxu0 %v1210
        %v1817 = vpop.f32.mrf.mxu0
        %v1818 = vadd.f32 %v1755, %v1817
        %v1819 = vpop.f32.mrf.mxu0
        %v1820 = vadd.f32 %v1757, %v1819
        %v1821 = vpop.f32.mrf.mxu0
        %v1822 = vadd.f32 %v1759, %v1821
        %v1823 = vpop.f32.mrf.mxu0
        %v1824 = vadd.f32 %v1761, %v1823
        %1825 = vmatprep.mubr.bf16.mxu0 %v1216
        %1826 = vmatmul.mubr.bf16.gmra.mxu0 %v1215
        %v1827 = vpop.f32.mrf.mxu0
        %v1828 = vadd.f32 %v1765, %v1827
        %v1829 = vpop.f32.mrf.mxu0
        %v1830 = vadd.f32 %v1767, %v1829
        %v1831 = vpop.f32.mrf.mxu0
        %v1832 = vadd.f32 %v1769, %v1831
        %v1833 = vpop.f32.mrf.mxu0
        %v1834 = vadd.f32 %v1771, %v1833
        %1835 = vdwg.mxu0
        %1836 = vmatprep.subr.bf16.mxu0 %v1629
        %1837 = vmatpush1.bf16.msra.mxu0 %v1628
        %1838 = vmatprep.subr.bf16.mxu0 %v1627
        %1839 = vmatpush1.bf16.msra.mxu0 %v1626
        %1840 = vmatprep.subr.bf16.mxu0 %v1625
        %1841 = vmatpush1.bf16.msra.mxu0 %v1624
        %1842 = vmatprep.subr.bf16.mxu0 %v1623
        %1843 = vmatpush1.bf16.msra.mxu0 %v1622
        %1844 = vmatprep.subr.bf16.mxu0 %v1621
        %1845 = vmatpush1.bf16.msra.mxu0 %v1620
        %1846 = vmatprep.subr.bf16.mxu0 %v1619
        %1847 = vmatpush1.bf16.msra.mxu0 %v1618
        %1848 = vmatprep.subr.bf16.mxu0 %v1617
        %1849 = vmatpush1.bf16.msra.mxu0 %v1616
        %1850 = vmatprep.subr.bf16.mxu0 %v1615
        %1851 = vmatpush1.bf16.msra.mxu0 %v1614
        %1852 = vmatprep.subr.bf16.mxu0 0
        %1853 = vmatpush2.bf16.msra.mxu0 0
        %1854 = vmatprep.subr.bf16.mxu0 0
        %1855 = vmatpush2.bf16.msra.mxu0 0
        %1856 = vmatprep.subr.bf16.mxu0 0
        %1857 = vmatpush2.bf16.msra.mxu0 0
        %1858 = vmatprep.subr.bf16.mxu0 0
        %1859 = vmatpush2.bf16.msra.mxu0 0
        %1860 = vmatprep.subr.bf16.mxu0 0
        %1861 = vmatpush2.bf16.msra.mxu0 0
        %1862 = vmatprep.subr.bf16.mxu0 0
        %1863 = vmatpush2.bf16.msra.mxu0 0
        %1864 = vmatprep.subr.bf16.mxu0 0
        %1865 = vmatpush2.bf16.msra.mxu0 0
        %1866 = vmatprep.subr.bf16.mxu0 0
        %1867 = vmatpush2.bf16.msra.mxu0 0
        %1868 = vmatprep.mubr.bf16.mxu0 0
        %1869 = vmatmul.mubr.bf16.gmra.mxu0 %v1207
        %v1870 = vpop.f32.mrf.mxu0
        %v1871 = vadd.f32 %v1808, %v1870
        %v1872 = vpop.f32.mrf.mxu0
        %v1873 = vadd.f32 %v1810, %v1872
        %v1874 = vpop.f32.mrf.mxu0
        %v1875 = vadd.f32 %v1812, %v1874
        %v1876 = vpop.f32.mrf.mxu0
        %v1877 = vadd.f32 %v1814, %v1876
        %1878 = vmatprep.mubr.bf16.mxu0 0
        %1879 = vmatmul.mubr.bf16.gmra.mxu0 %v1212
        %v1880 = vpop.f32.mrf.mxu0
        %v1881 = vadd.f32 %v1818, %v1880
        %v1882 = vpop.f32.mrf.mxu0
        %v1883 = vadd.f32 %v1820, %v1882
        %v1884 = vpop.f32.mrf.mxu0
        %v1885 = vadd.f32 %v1822, %v1884
        %v1886 = vpop.f32.mrf.mxu0
        %v1887 = vadd.f32 %v1824, %v1886
        %1888 = vmatprep.mubr.bf16.mxu0 0
        %1889 = vmatmul.mubr.bf16.gmra.mxu0 %v1217
        %v1890 = vpop.f32.mrf.mxu0
        %v1891 = vadd.f32 %v1828, %v1890
        %v1892 = vpop.f32.mrf.mxu0
        %v1893 = vadd.f32 %v1830, %v1892
        %v1894 = vpop.f32.mrf.mxu0
        %v1895 = vadd.f32 %v1832, %v1894
        %v1896 = vpop.f32.mrf.mxu0
        %v1897 = vadd.f32 %v1834, %v1896
        %1898 = vdwg.mxu0
        %v1899 = vmax.f32 %v1871, 0.0
        %v1900 = vmax.f32 %v1873, 0.0
        %v1901 = vmax.f32 %v1875, 0.0
        %v1902 = vmax.f32 %v1877, 0.0
        %v1903 = vmax.f32 %v1881, 0.0
        %v1904 = vmax.f32 %v1883, 0.0
        %v1905 = vmax.f32 %v1885, 0.0
        %v1906 = vmax.f32 %v1887, 0.0
        %v1907 = vmax.f32 %v1891, 0.0
        %v1908 = vmax.f32 %v1893, 0.0
        %v1909 = vmax.f32 %v1895, 0.0
        %v1910 = vmax.f32 %v1897, 0.0
        %v1911 = vpack.c.bf16 %v1901, %v1899
        %v1912 = vpack.c.bf16 %v1902, %v1900
        %v1913 = vpack.c.bf16 %v1905, %v1903
        %v1914 = vpack.c.bf16 %v1906, %v1904
        %v1915 = vpack.c.bf16 %v1909, %v1907
        %v1916 = vpack.c.bf16 %v1910, %v1908
        %v1917 = vld [vmem:[%s1] sm:$0x3]
        %vm1918 = vcmask 367616
        %v1920 = vsel %vm1918, %v1917, 0
        %v1922 = vsel %vm1185, 4294967295, 65535
        %v1923 = vsel %vm558, %v1922, 0
        %v1925 = vand.u32 %v1915, %v1923
        %v1928 = vand.u32 %v1916, %v1923
        %1930 = vmatprep.subr.bf16.mxu0 0
        %1931 = vmatpush1.bf16.msra.mxu0 0
        %1932 = vmatprep.subr.bf16.mxu0 0
        %1933 = vmatpush1.bf16.msra.mxu0 0
        %1934 = vmatprep.subr.bf16.mxu0 0
        %1935 = vmatpush1.bf16.msra.mxu0 0
        %1936 = vmatprep.subr.bf16.mxu0 0
        %1937 = vmatpush1.bf16.msra.mxu0 0
        %1938 = vmatprep.subr.bf16.mxu0 0
        %1939 = vmatpush1.bf16.msra.mxu0 0
        %1940 = vmatprep.subr.bf16.mxu0 %v1928
        %1941 = vmatpush1.bf16.msra.mxu0 %v1925
        %1942 = vmatprep.subr.bf16.mxu0 %v1914
        %1943 = vmatpush1.bf16.msra.mxu0 %v1913
        %1944 = vmatprep.subr.bf16.mxu0 %v1912
        %1945 = vmatpush1.bf16.msra.mxu0 %v1911
        %1946 = vmatprep.subr.bf16.mxu0 0
        %1947 = vmatpush2.bf16.msra.mxu0 0
        %1948 = vmatprep.subr.bf16.mxu0 0
        %1949 = vmatpush2.bf16.msra.mxu0 0
        %1950 = vmatprep.subr.bf16.mxu0 0
        %1951 = vmatpush2.bf16.msra.mxu0 0
        %1952 = vmatprep.subr.bf16.mxu0 0
        %1953 = vmatpush2.bf16.msra.mxu0 0
        %1954 = vmatprep.subr.bf16.mxu0 0
        %1955 = vmatpush2.bf16.msra.mxu0 0
        %1956 = vmatprep.subr.bf16.mxu0 0
        %1957 = vmatpush2.bf16.msra.mxu0 0
        %1958 = vmatprep.subr.bf16.mxu0 0
        %1959 = vmatpush2.bf16.msra.mxu0 0
        %1960 = vmatprep.subr.bf16.mxu0 0
        %1961 = vmatpush2.bf16.msra.mxu0 0
        %1962 = vmatprep.mubr.bf16.mxu0 0
        %1963 = vmatmul.mubr.bf16.gmra.mxu0 %v1920
        %v1964 = vpop.f32.mrf.mxu0
        %v1965 = vadd.f32 0.0, %v1964
        %v1966 = vpop.f32.mrf.mxu0
        %v1967 = vadd.f32 0.0, %v1966
        %v1968 = vpop.f32.mrf.mxu0
        %v1969 = vpop.f32.mrf.mxu0
        %1970 = vdwg.mxu0
        %v1971 = vmul.f32 %v1965, 0.11111111
        %v1972 = vmul.f32 %v1967, 0.11111111
        %v1973 = vpack.c.bf16 %v1971, %v1971
        %v1974 = vpack.c.bf16 %v1972, %v1972
        %v1975 = vld [vmem:[#allocation7] sm:$0xff]
        %v1976 = vld [vmem:[#allocation7 + $0x8] sm:$0xff]
        %v1977 = vld [vmem:[#allocation7 + $0x10] sm:$0xff]
        %v1978 = vld [vmem:[#allocation7 + $0x18] sm:$0xff]
        %v1979 = vld [vmem:[#allocation7 + $0x20] sm:$0xff]
        %v1980 = vld [vmem:[#allocation7 + $0x28] sm:$0xff]
        %v1981 = vld [vmem:[#allocation7 + $0x30] sm:$0xff]
        %v1982 = vld [vmem:[#allocation7 + $0x38] sm:$0xff]
        %v1983 = vld [vmem:[#allocation7 + $0x40] sm:$0xff]
        %v1984 = vld [vmem:[#allocation7 + $0x48] sm:$0xff]
        %v1985 = vld [vmem:[#allocation7 + $0x50] sm:$0xff]
        %v1986 = vld [vmem:[#allocation7 + $0x58] sm:$0xff]
        %v1987 = vld [vmem:[#allocation7 + $0x60] sm:$0xff]
        %v1988 = vld [vmem:[#allocation7 + $0x68] sm:$0xff]
        %v1989 = vld [vmem:[#allocation7 + $0x70] sm:$0xff]
        %v1990 = vld [vmem:[#allocation7 + $0x78] sm:$0xff]
        %v1991 = vld [vmem:[#allocation7 + $0x80] sm:$0xff]
        %v1992 = vld [vmem:[#allocation7 + $0x88] sm:$0xff]
        %v1993 = vld [vmem:[#allocation7 + $0x90] sm:$0xff]
        %v1994 = vld [vmem:[#allocation7 + $0x98] sm:$0xff]
        %v1995 = vld [vmem:[#allocation7 + $0xa0] sm:$0xff]
        %v1996 = vld [vmem:[#allocation7 + $0xa8] sm:$0xff]
        %v1997 = vld [vmem:[#allocation7 + $0xb0] sm:$0xff]
        %v1998 = vld [vmem:[#allocation7 + $0xb8] sm:$0xff]
        %v1999 = vld [vmem:[#allocation7 + $0xc0] sm:$0xff]
        %v2000 = vld [vmem:[#allocation7 + $0xc8] sm:$0xff]
        %v2001 = vld [vmem:[#allocation7 + $0xd0] sm:$0xff]
        %v2002 = vld [vmem:[#allocation7 + $0xd8] sm:$0xff]
        %v2003 = vld [vmem:[#allocation7 + $0xe0] sm:$0xff]
        %v2004 = vld [vmem:[#allocation7 + $0xe8] sm:$0xff]
        %v2005 = vld [vmem:[#allocation7 + $0xf0] sm:$0xff]
        %v2006 = vld [vmem:[#allocation7 + $0xf8] sm:$0xff]
        %v2007 = vld [vmem:[%s9] sm:$0x3]
        %v2009 = vlaneseq
        %v2010 = vshrl.u32 %v2009, 7
        %v2011 = vsub.s32 0, %v2010
        %v2012 = vrot.slane %v2007, %v2011
        %v2013 = vlaneseq
        %v2014 = vshrl.u32 %v2013, 7
        %v2015 = vsub.s32 1, %v2014
        %v2016 = vrot.slane %v2007, %v2015
        %v2051 = vunpack.c.l.b16 %v1975
        %v2052 = vunpack.c.h.b16 %v1975
        %v2053 = vunpack.c.l.b16 %v1976
        %v2054 = vunpack.c.h.b16 %v1976
        %v2055 = vunpack.c.l.b16 %v1977
        %v2056 = vunpack.c.h.b16 %v1977
        %v2057 = vunpack.c.l.b16 %v1978
        %v2058 = vunpack.c.h.b16 %v1978
        %v2059 = vunpack.c.l.b16 %v1979
        %v2060 = vunpack.c.h.b16 %v1979
        %v2061 = vunpack.c.l.b16 %v1980
        %v2062 = vunpack.c.h.b16 %v1980
        %v2063 = vunpack.c.l.b16 %v1981
        %v2064 = vunpack.c.h.b16 %v1981
        %v2065 = vunpack.c.l.b16 %v1982
        %v2066 = vunpack.c.h.b16 %v1982
        %v2067 = vunpack.c.l.b16 %v1983
        %v2068 = vunpack.c.h.b16 %v1983
        %v2069 = vunpack.c.l.b16 %v1984
        %v2070 = vunpack.c.h.b16 %v1984
        %v2071 = vunpack.c.l.b16 %v1985
        %v2072 = vunpack.c.h.b16 %v1985
        %v2073 = vunpack.c.l.b16 %v1986
        %v2074 = vunpack.c.h.b16 %v1986
        %v2075 = vunpack.c.l.b16 %v1987
        %v2076 = vunpack.c.h.b16 %v1987
        %v2077 = vunpack.c.l.b16 %v1988
        %v2078 = vunpack.c.h.b16 %v1988
        %v2079 = vunpack.c.l.b16 %v1989
        %v2080 = vunpack.c.h.b16 %v1989
        %v2081 = vunpack.c.l.b16 %v1990
        %v2082 = vunpack.c.h.b16 %v1990
        %v2083 = vunpack.c.l.b16 %v1991
        %v2084 = vunpack.c.h.b16 %v1991
        %v2085 = vunpack.c.l.b16 %v1992
        %v2086 = vunpack.c.h.b16 %v1992
        %v2087 = vunpack.c.l.b16 %v1993
        %v2088 = vunpack.c.h.b16 %v1993
        %v2089 = vunpack.c.l.b16 %v1994
        %v2090 = vunpack.c.h.b16 %v1994
        %v2091 = vunpack.c.l.b16 %v1995
        %v2092 = vunpack.c.h.b16 %v1995
        %v2093 = vunpack.c.l.b16 %v1996
        %v2094 = vunpack.c.h.b16 %v1996
        %v2095 = vunpack.c.l.b16 %v1997
        %v2096 = vunpack.c.h.b16 %v1997
        %v2097 = vunpack.c.l.b16 %v1998
        %v2098 = vunpack.c.h.b16 %v1998
        %v2099 = vunpack.c.l.b16 %v1999
        %v2100 = vunpack.c.h.b16 %v1999
        %v2101 = vunpack.c.l.b16 %v2000
        %v2102 = vunpack.c.h.b16 %v2000
        %v2103 = vunpack.c.l.b16 %v2001
        %v2104 = vunpack.c.h.b16 %v2001
        %v2105 = vunpack.c.l.b16 %v2002
        %v2106 = vunpack.c.h.b16 %v2002
        %v2107 = vunpack.c.l.b16 %v2003
        %v2108 = vunpack.c.h.b16 %v2003
        %v2109 = vunpack.c.l.b16 %v2004
        %v2110 = vunpack.c.h.b16 %v2004
        %v2111 = vunpack.c.l.b16 %v2005
        %v2112 = vunpack.c.h.b16 %v2005
        %v2113 = vunpack.c.l.b16 %v2006
        %v2114 = vunpack.c.h.b16 %v2006
        %v2115 = vpack.c.b16 %v2053, %v2051
        %v2116 = vpack.c.b16 %v2054, %v2052
        %v2117 = vpack.c.b16 %v2057, %v2055
        %v2118 = vpack.c.b16 %v2058, %v2056
        %v2119 = vpack.c.b16 %v2061, %v2059
        %v2120 = vpack.c.b16 %v2062, %v2060
        %v2121 = vpack.c.b16 %v2065, %v2063
        %v2122 = vpack.c.b16 %v2066, %v2064
        %v2123 = vpack.c.b16 %v2069, %v2067
        %v2124 = vpack.c.b16 %v2070, %v2068
        %v2125 = vpack.c.b16 %v2073, %v2071
        %v2126 = vpack.c.b16 %v2074, %v2072
        %v2127 = vpack.c.b16 %v2077, %v2075
        %v2128 = vpack.c.b16 %v2078, %v2076
        %v2129 = vpack.c.b16 %v2081, %v2079
        %v2130 = vpack.c.b16 %v2082, %v2080
        %v2131 = vpack.c.b16 %v2085, %v2083
        %v2132 = vpack.c.b16 %v2086, %v2084
        %v2133 = vpack.c.b16 %v2089, %v2087
        %v2134 = vpack.c.b16 %v2090, %v2088
        %v2135 = vpack.c.b16 %v2093, %v2091
        %v2136 = vpack.c.b16 %v2094, %v2092
        %v2137 = vpack.c.b16 %v2097, %v2095
        %v2138 = vpack.c.b16 %v2098, %v2096
        %v2139 = vpack.c.b16 %v2101, %v2099
        %v2140 = vpack.c.b16 %v2102, %v2100
        %v2141 = vpack.c.b16 %v2105, %v2103
        %v2142 = vpack.c.b16 %v2106, %v2104
        %v2143 = vpack.c.b16 %v2109, %v2107
        %v2144 = vpack.c.b16 %v2110, %v2108
        %v2145 = vpack.c.b16 %v2113, %v2111
        %v2146 = vpack.c.b16 %v2114, %v2112
        %2179 = vmatprep.subr.bf16.mxu0 %v2130
        %2180 = vmatpush1.bf16.msra.mxu0 %v2129
        %2181 = vmatprep.subr.bf16.mxu0 %v2128
        %2182 = vmatpush1.bf16.msra.mxu0 %v2127
        %2183 = vmatprep.subr.bf16.mxu0 %v2126
        %2184 = vmatpush1.bf16.msra.mxu0 %v2125
        %2185 = vmatprep.subr.bf16.mxu0 %v2124
        %2186 = vmatpush1.bf16.msra.mxu0 %v2123
        %2187 = vmatprep.subr.bf16.mxu0 %v2122
        %2188 = vmatpush1.bf16.msra.mxu0 %v2121
        %2189 = vmatprep.subr.bf16.mxu0 %v2120
        %2190 = vmatpush1.bf16.msra.mxu0 %v2119
        %2191 = vmatprep.subr.bf16.mxu0 %v2118
        %2192 = vmatpush1.bf16.msra.mxu0 %v2117
        %2193 = vmatprep.subr.bf16.mxu0 %v2116
        %2194 = vmatpush1.bf16.msra.mxu0 %v2115
        %2195 = vmatprep.subr.bf16.mxu0 %v2146
        %2196 = vmatpush2.bf16.msra.mxu0 %v2145
        %2197 = vmatprep.subr.bf16.mxu0 %v2144
        %2198 = vmatpush2.bf16.msra.mxu0 %v2143
        %2199 = vmatprep.subr.bf16.mxu0 %v2142
        %2200 = vmatpush2.bf16.msra.mxu0 %v2141
        %2201 = vmatprep.subr.bf16.mxu0 %v2140
        %2202 = vmatpush2.bf16.msra.mxu0 %v2139
        %2203 = vmatprep.subr.bf16.mxu0 %v2138
        %2204 = vmatpush2.bf16.msra.mxu0 %v2137
        %2205 = vmatprep.subr.bf16.mxu0 %v2136
        %2206 = vmatpush2.bf16.msra.mxu0 %v2135
        %2207 = vmatprep.subr.bf16.mxu0 %v2134
        %2208 = vmatpush2.bf16.msra.mxu0 %v2133
        %2209 = vmatprep.subr.bf16.mxu0 %v2132
        %2210 = vmatpush2.bf16.msra.mxu0 %v2131
        %2211 = vmatprep.mubr.bf16.mxu0 %v1974
        %2212 = vmatmul.mubr.bf16.gmra.mxu0 %v1973
        %v2213 = vpop.f32.mrf.mxu0
        %v2214 = vadd.f32 %v2012, %v2213
        %v2215 = vpop.f32.mrf.mxu0
        %v2216 = vadd.f32 %v2016, %v2215
        %v2217 = vpop.f32.mrf.mxu0
        %v2218 = vpop.f32.mrf.mxu0
        %2219 = vdwg.mxu0
        %v2222 = vcombine.low %v2214, %v2216
        %2224 = vst [vmem:[%s396] sm:$0xff] %v2222
        %s2225 = sand.u32 %s249, 1
        %s2226 = scalar_lea.sflag [#allocation4], %s2225
        %s2227 = sand.u32 %s249, 1
        %s2228 = smul.addr %s2227, 8
        %s2229 = scalar_lea.vmem [#allocation8], %s2228
        // Predicated region
        $region73: #{tpu_custom_call.1} parent=59 // pred_check
          %p2230 = pneg %p259
        $region74: #{tpu_custom_call.1} parent=59 // pred_check_branch
          %2232 = sbr.rel (%p2230) target = $region76
        $region75: #{tpu_custom_call.1} parent=59 // pred_region
          %s2234 = ssub.s32 128, 128
          %2235 = vsyncadd %s2226, %s2234
          %s2236 = smul.addr %s26, 2
          %s2237 = smul.addr %s2236, 64
          %s2238 = scalar_lea.hbm %s10, %s2237
          %s2240 = sshll.u32 %s2229, 4
          %s2241 = int_to_ptr.vmem [resolvable:$true] %s2240
          %2243 = dma.vmem_to_hbm [thread:$0]  %s2241, 128, %s2238, %s2226
        $region76: #{tpu_custom_call.1} parent=59 // pred_fallthru
          _
      $region60: #{tpu_custom_call.1} parent=5 // pred_fallthru
        _
      %p2244 = scmp.le.s32.totalorder 2, %s21
      // Predicated region
      $region77: #{tpu_custom_call.1} parent=5 // pred_check
        %p2245 = pneg %p2244
      $region78: #{tpu_custom_call.1} parent=5 // pred_check_branch
        %2247 = sbr.rel (%p2245) target = $region80
      $region79: #{tpu_custom_call.1} parent=5 // pred_region
        %s2248 = ssub.s32 %s21, 2
        // Predicated region
        $region81: #{tpu_custom_call.1} parent=79 // pred_check
          %p2249 = pneg %p265
        $region82: #{tpu_custom_call.1} parent=79 // pred_check_branch
          %2251 = sbr.rel (%p2249) target = $region84
        $region83: #{tpu_custom_call.1} parent=79 // pred_region
          %s2252 = sand.u32 %s250, 1
          %s2253 = scalar_lea.sflag [#allocation4], %s2252
          %s2254 = sand.u32 %s250, 1
          %s2255 = smul.addr %s2254, 8
          %s2256 = scalar_lea.vmem [#allocation8], %s2255
          %2257 = dma.done %s2253, 128
        $region84: #{tpu_custom_call.1} parent=79 // pred_fallthru
          _
      $region80: #{tpu_custom_call.1} parent=5 // pred_fallthru
        _
    $region6: #{tpu_custom_call.1} parent=1 // loop_footer
      %s25 = sadd.s32 1, %s21
    $region7: #{tpu_custom_call.1} parent=1 // loop_footer_branch
      %20 = sbr.rel target = $region3
    $region8: #{tpu_custom_call.1} parent=1 // loop_exit
      _
    %2258 = vsyncpa [#allocation3], 1
    %s2259 = scalar_lea.sflag [#allocation3], 1
    %2260 = vsyncpa %s2259, 1
    %2261 = vsyncpa [#allocation6], 1
    %2262 = vsyncpa [#allocation4], 1
    %s2263 = scalar_lea.sflag [#allocation4], 1
    %2264 = vsyncpa %s2263, 1

</llo_original>
